<compile_context>
chip_gen: v7x
topology: tpu7x:2x2x1
jax: 0.10.0
libtpu: 0.0.40
codegen_flags: <defaults>
</compile_context>

<pallas_src>
import jax
import jax.numpy as jnp
from jax.experimental import pallas as pl
from jax.experimental.pallas import tpu as pltpu

BN_EPS = 1e-5
HID = 32
NUM_LAYERS = 4


def _vmem(n):
    return [pl.BlockSpec(memory_space=pltpu.MemorySpace.VMEM) for _ in range(n)]


# ---------------------------------------------------------------------------
# in-kernel helper: row-softmax-normalised cosine-similarity adjacency
# ---------------------------------------------------------------------------
def _cos_softmax_adj(v_bf16):
    # Gram matrix first (bf16 MXU contraction, f32 accumulate) ...
    g = jax.lax.dot_general(v_bf16, v_bf16, (((1,), (1,)), ((), ())),
                            preferred_element_type=jnp.float32)          # [N, N]
    n = g.shape[0]
    # ... then normalise from its diagonal (no normalised [N, D] copy needed).
    row = jax.lax.broadcasted_iota(jnp.int32, (n, n), 0)
    col = jax.lax.broadcasted_iota(jnp.int32, (n, n), 1)
    eye = row == col
    diag_r = jnp.sum(jnp.where(eye, g, 0.0), axis=1, keepdims=True)      # [N, 1]
    diag_c = jnp.sum(jnp.where(eye, g, 0.0), axis=0, keepdims=True)      # [1, N]
    inv_r = jax.lax.rsqrt(jnp.maximum(diag_r, 1e-12))
    inv_c = jax.lax.rsqrt(jnp.maximum(diag_c, 1e-12))
    sim = g * inv_r * inv_c
    # row-softmax normalisation
    m = jnp.max(sim, axis=-1, keepdims=True)
    e = jnp.exp(sim - m)
    return e / jnp.sum(e, axis=-1, keepdims=True)


# ---------------------------------------------------------------------------
# single fused kernel for the whole forward pass
# ---------------------------------------------------------------------------
def gcn4_fused_kernel(x_ref, vb_ref, vf_ref,
                      w1_ref, b1_ref, alpha_ref, w2_ref, b2_ref, wp_ref, bp_ref,
                      gbw_ref, gbb_ref, gfw_ref, gfb_ref,
                      pbw_ref, pbb_ref, pfw_ref, pfb_ref,
                      out_ref):
    # --- input MLP: Linear(2,32) (BN folded in) -> PReLU -> Dropout(0) -> Linear(32,32)
    h = jnp.dot(x_ref[...], w1_ref[...],
                preferred_element_type=jnp.float32) + b1_ref[...]
    h = jnp.where(h >= 0.0, h, alpha_ref[...] * h)            # PReLU (shared alpha)
    feat = jnp.dot(h, w2_ref[...],
                   preferred_element_type=jnp.float32) + b2_ref[...]

    # --- node_projection: Linear(32, 1)
    nodes_scores = jnp.dot(feat, wp_ref[...],
                           preferred_element_type=jnp.float32) + bp_ref[...]

    # --- dense cosine adjacencies (shared by all 4 layers of each branch)
    adj_body = _cos_softmax_adj(vb_ref[...])
    adj_face = _cos_softmax_adj(vf_ref[...])

    # --- 4 CMCosConv layers per branch; branches interleaved layer-by-layer
    xb = feat
    xf = feat
    for i in range(NUM_LAYERS):                               # static unroll
        hb = jnp.dot(xb, gbw_ref[i],
                     preferred_element_type=jnp.float32) + gbb_ref[i]
        hf = jnp.dot(xf, gfw_ref[i],
                     preferred_element_type=jnp.float32) + gfb_ref[i]
        xb = jnp.dot(adj_body, hb, preferred_element_type=jnp.float32)
        xf = jnp.dot(adj_face, hf, preferred_element_type=jnp.float32)

    # --- final projections and sum of the three score branches
    sb = jnp.dot(xb, pbw_ref[...],
                 preferred_element_type=jnp.float32) + pbb_ref[...]
    sf = jnp.dot(xf, pfw_ref[...],
                 preferred_element_type=jnp.float32) + pfb_ref[...]
    out_ref[...] = nodes_scores + sb + sf


# ---------------------------------------------------------------------------
# wrapper
# ---------------------------------------------------------------------------
@jax.jit
def gcn4_forward(x, visual_body, visual_face, prepped):
    N = x.shape[0]
    out = pl.pallas_call(
        gcn4_fused_kernel,
        out_shape=jax.ShapeDtypeStruct((N, 1), jnp.float32),
        in_specs=_vmem(18),
        out_specs=pl.BlockSpec(memory_space=pltpu.MemorySpace.VMEM),
    )(x,
      visual_body.astype(jnp.bfloat16),   # bf16 halves the only sizeable DMA
      visual_face.astype(jnp.bfloat16),
      prepped["w1"], prepped["b1"], prepped["alpha"],
      prepped["w2"], prepped["b2"], prepped["wp"], prepped["bp"],
      prepped["gb_w"], prepped["gb_b"], prepped["gf_w"], prepped["gf_b"],
      prepped["pb_w"], prepped["pb_b"], prepped["pf_w"], prepped["pf_b"])
    return out[:, 0]                      # .squeeze() -> [N]


# ---------------------------------------------------------------------------
# host-side parameter preparation: fold BN into Linear(2,32), stack GCN layers
# ---------------------------------------------------------------------------
def prep_params(params):
    mlp = params["mlp"]
    scale = mlp["bn_gamma"] * jax.lax.rsqrt(mlp["bn_var"] + BN_EPS)   # [1, 32]
    w1 = mlp["w1"] * scale
    b1 = (mlp["b1"] - mlp["bn_mean"]) * scale + mlp["bn_beta"]
    gb_w = jnp.stack([w for (w, _) in params["gcn_body"]])            # [4,32,32]
    gb_b = jnp.stack([b for (_, b) in params["gcn_body"]])            # [4,1,32]
    gf_w = jnp.stack([w for (w, _) in params["gcn_face"]])
    gf_b = jnp.stack([b for (_, b) in params["gcn_face"]])
    return dict(
        w1=w1, b1=b1, alpha=mlp["prelu_alpha"],
        w2=mlp["w2"], b2=mlp["b2"], wp=mlp["wp"], bp=mlp["bp"],
        gb_w=gb_w, gb_b=gb_b, gf_w=gf_w, gf_b=gf_b,
        pb_w=params["proj_body"][0], pb_b=params["proj_body"][1],
        pf_w=params["proj_face"][0], pf_b=params["proj_face"][1],
    )


# ---------------------------------------------------------------------------
# deterministic parameter init (PyTorch-style uniform(-1/sqrt(fan_in), +))
# ---------------------------------------------------------------------------
def linear_params(key, fan_in, fan_out):
    kw, kb = jax.random.split(key)
    bound = 1.0 / float(jnp.sqrt(fan_in))
    w = jax.random.uniform(kw, (fan_in, fan_out), jnp.float32, -bound, bound)
    b = jax.random.uniform(kb, (1, fan_out), jnp.float32, -bound, bound)
    return w, b


def init_params(key):
    ks = list(jax.random.split(key, 16))
    w1, b1 = linear_params(ks[0], 2, HID)
    w2, b2 = linear_params(ks[1], HID, HID)
    wp, bp = linear_params(ks[2], HID, 1)
    mlp = dict(
        w1=w1, b1=b1, w2=w2, b2=b2, wp=wp, bp=bp,
        bn_gamma=jnp.ones((1, HID), jnp.float32),
        bn_beta=jnp.zeros((1, HID), jnp.float32),
        bn_mean=jnp.zeros((1, HID), jnp.float32),
        bn_var=jnp.ones((1, HID), jnp.float32),
        prelu_alpha=jnp.full((1, 1), 0.25, jnp.float32),
    )
    gcn_body = [linear_params(ks[3 + i], HID, HID) for i in range(4)]
    gcn_face = [linear_params(ks[7 + i], HID, HID) for i in range(4)]
    proj_body = linear_params(ks[11], HID, 1)
    proj_face = linear_params(ks[12], HID, 1)
    return dict(mlp=mlp, gcn_body=gcn_body, gcn_face=gcn_face,
                proj_body=proj_body, proj_face=proj_face)


if __name__ == "__main__":
    key = jax.random.PRNGKey(0)
    kp, kx, kvb, kvf = jax.random.split(key, 4)

    N = 8                 # nodes in the batched graph
    VISUAL_BODY = 2048    # body visual_dim
    VISUAL_FACE = 512     # face visual_dim

    params = init_params(kp)
    prepped = prep_params(params)
    x = jax.random.normal(kx, (N, 2), jnp.float32)                 # batch_graph.x
    visual_body = jax.random.normal(kvb, (N, VISUAL_BODY), jnp.float32)
    visual_face = jax.random.normal(kvf, (N, VISUAL_FACE), jnp.float32)

    out = gcn4_forward(x, visual_body, visual_face, prepped)
    out = jax.block_until_ready(out)
    assert out.shape == (N,) and out.dtype == jnp.float32
    print("KERNEL_OK")
</pallas_src>

<mosaic_0001>
module attributes {stable_mosaic.version = 11 : i64} {
  func.func @gcn4_fused_kernel(%arg0: memref<8x2xf32, #tpu.memory_space<vmem>>, %arg1: memref<8x2048xbf16, #tpu.memory_space<vmem>>, %arg2: memref<8x512xbf16, #tpu.memory_space<vmem>>, %arg3: memref<2x32xf32, #tpu.memory_space<vmem>>, %arg4: memref<1x32xf32, #tpu.memory_space<vmem>>, %arg5: memref<1x1xf32, #tpu.memory_space<vmem>>, %arg6: memref<32x32xf32, #tpu.memory_space<vmem>>, %arg7: memref<1x32xf32, #tpu.memory_space<vmem>>, %arg8: memref<32x1xf32, #tpu.memory_space<vmem>>, %arg9: memref<1x1xf32, #tpu.memory_space<vmem>>, %arg10: memref<4x32x32xf32, #tpu.memory_space<vmem>>, %arg11: memref<4x1x32xf32, #tpu.memory_space<vmem>>, %arg12: memref<4x32x32xf32, #tpu.memory_space<vmem>>, %arg13: memref<4x1x32xf32, #tpu.memory_space<vmem>>, %arg14: memref<32x1xf32, #tpu.memory_space<vmem>>, %arg15: memref<1x1xf32, #tpu.memory_space<vmem>>, %arg16: memref<32x1xf32, #tpu.memory_space<vmem>>, %arg17: memref<1x1xf32, #tpu.memory_space<vmem>>, %arg18: memref<8x1xf32, #tpu.memory_space<vmem>>) attributes {dimension_semantics = [], scalar_prefetch = 0 : i64, scratch_operands = 0 : i64, tpu.core_type = #tpu.core_type<tc>} {
    %c0 = arith.constant 0 : index
    %c0_0 = arith.constant 0 : index
    %0 = vector.load %arg0[%c0, %c0_0] : memref<8x2xf32, #tpu.memory_space<vmem>>, vector<8x2xf32>
    %c0_1 = arith.constant 0 : index
    %c0_2 = arith.constant 0 : index
    %1 = vector.load %arg3[%c0_1, %c0_2] : memref<2x32xf32, #tpu.memory_space<vmem>>, vector<2x32xf32>
    %cst = arith.constant dense<0.000000e+00> : vector<8x32xf32>
    %2 = tpu.matmul %0, %1, %cst {dimension_numbers = #tpu.dot_dimension_numbers<[1], [0], [0], [1], [0, 0, 1, 1], [], []>} : vector<8x2xf32>, vector<2x32xf32>, vector<8x32xf32> -> vector<8x32xf32>
    %c0_3 = arith.constant 0 : index
    %c0_4 = arith.constant 0 : index
    %3 = vector.load %arg4[%c0_3, %c0_4] : memref<1x32xf32, #tpu.memory_space<vmem>>, vector<1x32xf32>
    %4 = vector.broadcast %3 : vector<1x32xf32> to vector<8x32xf32>
    %5 = arith.addf %2, %4 : vector<8x32xf32>
    %cst_5 = arith.constant 0.000000e+00 : f32
    %6 = vector.broadcast %cst_5 : f32 to vector<8x32xf32>
    %7 = arith.cmpf oge, %5, %6 : vector<8x32xf32>
    %c0_6 = arith.constant 0 : index
    %c0_7 = arith.constant 0 : index
    %8 = vector.load %arg5[%c0_6, %c0_7] : memref<1x1xf32, #tpu.memory_space<vmem>>, vector<1x1xf32>
    %9 = vector.broadcast %8 : vector<1x1xf32> to vector<8x32xf32>
    %10 = arith.mulf %9, %5 : vector<8x32xf32>
    %11 = arith.select %7, %5, %10 : vector<8x32xi1>, vector<8x32xf32>
    %c0_8 = arith.constant 0 : index
    %c0_9 = arith.constant 0 : index
    %12 = vector.load %arg6[%c0_8, %c0_9] : memref<32x32xf32, #tpu.memory_space<vmem>>, vector<32x32xf32>
    %cst_10 = arith.constant dense<0.000000e+00> : vector<8x32xf32>
    %13 = tpu.matmul %11, %12, %cst_10 {dimension_numbers = #tpu.dot_dimension_numbers<[1], [0], [0], [1], [0, 0, 1, 1], [], []>} : vector<8x32xf32>, vector<32x32xf32>, vector<8x32xf32> -> vector<8x32xf32>
    %c0_11 = arith.constant 0 : index
    %c0_12 = arith.constant 0 : index
    %14 = vector.load %arg7[%c0_11, %c0_12] : memref<1x32xf32, #tpu.memory_space<vmem>>, vector<1x32xf32>
    %15 = vector.broadcast %14 : vector<1x32xf32> to vector<8x32xf32>
    %16 = arith.addf %13, %15 : vector<8x32xf32>
    %c0_13 = arith.constant 0 : index
    %c0_14 = arith.constant 0 : index
    %17 = vector.load %arg8[%c0_13, %c0_14] : memref<32x1xf32, #tpu.memory_space<vmem>>, vector<32x1xf32>
    %cst_15 = arith.constant dense<0.000000e+00> : vector<8x1xf32>
    %18 = tpu.matmul %16, %17, %cst_15 {dimension_numbers = #tpu.dot_dimension_numbers<[1], [0], [0], [1], [0, 0, 1, 1], [], []>} : vector<8x32xf32>, vector<32x1xf32>, vector<8x1xf32> -> vector<8x1xf32>
    %c0_16 = arith.constant 0 : index
    %c0_17 = arith.constant 0 : index
    %19 = vector.load %arg9[%c0_16, %c0_17] : memref<1x1xf32, #tpu.memory_space<vmem>>, vector<1x1xf32>
    %20 = vector.broadcast %19 : vector<1x1xf32> to vector<8x1xf32>
    %21 = arith.addf %18, %20 : vector<8x1xf32>
    %c0_18 = arith.constant 0 : index
    %c0_19 = arith.constant 0 : index
    %22 = vector.load %arg1[%c0_18, %c0_19] : memref<8x2048xbf16, #tpu.memory_space<vmem>>, vector<8x2048xbf16>
    %cst_20 = arith.constant dense<0.000000e+00> : vector<8x8xf32>
    %23 = tpu.matmul %22, %22, %cst_20 {dimension_numbers = #tpu.dot_dimension_numbers<[1], [1], [0], [0], [0, 0, 1, 0], [], []>} : vector<8x2048xbf16>, vector<8x2048xbf16>, vector<8x8xf32> -> vector<8x8xf32>
    %24 = tpu.iota {dimensions = array<i32: 0>} : vector<8x8xi32>
    %25 = tpu.iota {dimensions = array<i32: 1>} : vector<8x8xi32>
    %26 = arith.cmpi eq, %24, %25 : vector<8x8xi32>
    %cst_21 = arith.constant 0.000000e+00 : f32
    %27 = vector.broadcast %cst_21 : f32 to vector<8x8xf32>
    %28 = arith.select %26, %23, %27 : vector<8x8xi1>, vector<8x8xf32>
    %cst_22 = arith.constant dense<0.000000e+00> : vector<8xf32>
    %29 = vector.multi_reduction <add>, %28, %cst_22 [1] : vector<8x8xf32> to vector<8xf32>
    %30 = vector.shape_cast %29 : vector<8xf32> to vector<8x1xf32>
    %cst_23 = arith.constant 0.000000e+00 : f32
    %31 = vector.broadcast %cst_23 : f32 to vector<8x8xf32>
    %32 = arith.select %26, %23, %31 : vector<8x8xi1>, vector<8x8xf32>
    %cst_24 = arith.constant dense<0.000000e+00> : vector<8xf32>
    %33 = vector.multi_reduction <add>, %32, %cst_24 [0] : vector<8x8xf32> to vector<8xf32>
    %34 = vector.shape_cast %33 : vector<8xf32> to vector<1x8xf32>
    %cst_25 = arith.constant 9.99999996E-13 : f32
    %35 = vector.broadcast %cst_25 : f32 to vector<8x1xf32>
    %36 = arith.maximumf %30, %35 : vector<8x1xf32>
    %37 = math.rsqrt %36 : vector<8x1xf32>
    %cst_26 = arith.constant 9.99999996E-13 : f32
    %38 = vector.broadcast %cst_26 : f32 to vector<1x8xf32>
    %39 = arith.maximumf %34, %38 : vector<1x8xf32>
    %40 = math.rsqrt %39 : vector<1x8xf32>
    %41 = vector.broadcast %37 : vector<8x1xf32> to vector<8x8xf32>
    %42 = arith.mulf %23, %41 : vector<8x8xf32>
    %43 = vector.broadcast %40 : vector<1x8xf32> to vector<8x8xf32>
    %44 = arith.mulf %42, %43 : vector<8x8xf32>
    %cst_27 = arith.constant dense<0xFF800000> : vector<8xf32>
    %45 = vector.multi_reduction <maximumf>, %44, %cst_27 [1] : vector<8x8xf32> to vector<8xf32>
    %46 = vector.shape_cast %45 : vector<8xf32> to vector<8x1xf32>
    %47 = vector.broadcast %46 : vector<8x1xf32> to vector<8x8xf32>
    %48 = arith.subf %44, %47 : vector<8x8xf32>
    %49 = math.exp %48 : vector<8x8xf32>
    %cst_28 = arith.constant dense<0.000000e+00> : vector<8xf32>
    %50 = vector.multi_reduction <add>, %49, %cst_28 [1] : vector<8x8xf32> to vector<8xf32>
    %51 = vector.shape_cast %50 : vector<8xf32> to vector<8x1xf32>
    %52 = vector.broadcast %51 : vector<8x1xf32> to vector<8x8xf32>
    %53 = arith.divf %49, %52 : vector<8x8xf32>
    %c0_29 = arith.constant 0 : index
    %c0_30 = arith.constant 0 : index
    %54 = vector.load %arg2[%c0_29, %c0_30] : memref<8x512xbf16, #tpu.memory_space<vmem>>, vector<8x512xbf16>
    %cst_31 = arith.constant dense<0.000000e+00> : vector<8x8xf32>
    %55 = tpu.matmul %54, %54, %cst_31 {dimension_numbers = #tpu.dot_dimension_numbers<[1], [1], [0], [0], [0, 0, 1, 0], [], []>} : vector<8x512xbf16>, vector<8x512xbf16>, vector<8x8xf32> -> vector<8x8xf32>
    %56 = tpu.iota {dimensions = array<i32: 0>} : vector<8x8xi32>
    %57 = tpu.iota {dimensions = array<i32: 1>} : vector<8x8xi32>
    %58 = arith.cmpi eq, %56, %57 : vector<8x8xi32>
    %cst_32 = arith.constant 0.000000e+00 : f32
    %59 = vector.broadcast %cst_32 : f32 to vector<8x8xf32>
    %60 = arith.select %58, %55, %59 : vector<8x8xi1>, vector<8x8xf32>
    %cst_33 = arith.constant dense<0.000000e+00> : vector<8xf32>
    %61 = vector.multi_reduction <add>, %60, %cst_33 [1] : vector<8x8xf32> to vector<8xf32>
    %62 = vector.shape_cast %61 : vector<8xf32> to vector<8x1xf32>
    %cst_34 = arith.constant 0.000000e+00 : f32
    %63 = vector.broadcast %cst_34 : f32 to vector<8x8xf32>
    %64 = arith.select %58, %55, %63 : vector<8x8xi1>, vector<8x8xf32>
    %cst_35 = arith.constant dense<0.000000e+00> : vector<8xf32>
    %65 = vector.multi_reduction <add>, %64, %cst_35 [0] : vector<8x8xf32> to vector<8xf32>
    %66 = vector.shape_cast %65 : vector<8xf32> to vector<1x8xf32>
    %cst_36 = arith.constant 9.99999996E-13 : f32
    %67 = vector.broadcast %cst_36 : f32 to vector<8x1xf32>
    %68 = arith.maximumf %62, %67 : vector<8x1xf32>
    %69 = math.rsqrt %68 : vector<8x1xf32>
    %cst_37 = arith.constant 9.99999996E-13 : f32
    %70 = vector.broadcast %cst_37 : f32 to vector<1x8xf32>
    %71 = arith.maximumf %66, %70 : vector<1x8xf32>
    %72 = math.rsqrt %71 : vector<1x8xf32>
    %73 = vector.broadcast %69 : vector<8x1xf32> to vector<8x8xf32>
    %74 = arith.mulf %55, %73 : vector<8x8xf32>
    %75 = vector.broadcast %72 : vector<1x8xf32> to vector<8x8xf32>
    %76 = arith.mulf %74, %75 : vector<8x8xf32>
    %cst_38 = arith.constant dense<0xFF800000> : vector<8xf32>
    %77 = vector.multi_reduction <maximumf>, %76, %cst_38 [1] : vector<8x8xf32> to vector<8xf32>
    %78 = vector.shape_cast %77 : vector<8xf32> to vector<8x1xf32>
    %79 = vector.broadcast %78 : vector<8x1xf32> to vector<8x8xf32>
    %80 = arith.subf %76, %79 : vector<8x8xf32>
    %81 = math.exp %80 : vector<8x8xf32>
    %cst_39 = arith.constant dense<0.000000e+00> : vector<8xf32>
    %82 = vector.multi_reduction <add>, %81, %cst_39 [1] : vector<8x8xf32> to vector<8xf32>
    %83 = vector.shape_cast %82 : vector<8xf32> to vector<8x1xf32>
    %84 = vector.broadcast %83 : vector<8x1xf32> to vector<8x8xf32>
    %85 = arith.divf %81, %84 : vector<8x8xf32>
    %c0_40 = arith.constant 0 : index
    %c0_41 = arith.constant 0 : index
    %c0_42 = arith.constant 0 : index
    %86 = vector.load %arg10[%c0_40, %c0_41, %c0_42] : memref<4x32x32xf32, #tpu.memory_space<vmem>>, vector<1x32x32xf32>
    %87 = vector.shape_cast %86 : vector<1x32x32xf32> to vector<32x32xf32>
    %cst_43 = arith.constant dense<0.000000e+00> : vector<8x32xf32>
    %88 = tpu.matmul %16, %87, %cst_43 {dimension_numbers = #tpu.dot_dimension_numbers<[1], [0], [0], [1], [0, 0, 1, 1], [], []>} : vector<8x32xf32>, vector<32x32xf32>, vector<8x32xf32> -> vector<8x32xf32>
    %c0_44 = arith.constant 0 : index
    %c0_45 = arith.constant 0 : index
    %c0_46 = arith.constant 0 : index
    %89 = vector.load %arg11[%c0_44, %c0_45, %c0_46] : memref<4x1x32xf32, #tpu.memory_space<vmem>>, vector<1x1x32xf32>
    %90 = vector.shape_cast %89 : vector<1x1x32xf32> to vector<1x32xf32>
    %91 = vector.broadcast %90 : vector<1x32xf32> to vector<8x32xf32>
    %92 = arith.addf %88, %91 : vector<8x32xf32>
    %c0_47 = arith.constant 0 : index
    %c0_48 = arith.constant 0 : index
    %c0_49 = arith.constant 0 : index
    %93 = vector.load %arg12[%c0_47, %c0_48, %c0_49] : memref<4x32x32xf32, #tpu.memory_space<vmem>>, vector<1x32x32xf32>
    %94 = vector.shape_cast %93 : vector<1x32x32xf32> to vector<32x32xf32>
    %cst_50 = arith.constant dense<0.000000e+00> : vector<8x32xf32>
    %95 = tpu.matmul %16, %94, %cst_50 {dimension_numbers = #tpu.dot_dimension_numbers<[1], [0], [0], [1], [0, 0, 1, 1], [], []>} : vector<8x32xf32>, vector<32x32xf32>, vector<8x32xf32> -> vector<8x32xf32>
    %c0_51 = arith.constant 0 : index
    %c0_52 = arith.constant 0 : index
    %c0_53 = arith.constant 0 : index
    %96 = vector.load %arg13[%c0_51, %c0_52, %c0_53] : memref<4x1x32xf32, #tpu.memory_space<vmem>>, vector<1x1x32xf32>
    %97 = vector.shape_cast %96 : vector<1x1x32xf32> to vector<1x32xf32>
    %98 = vector.broadcast %97 : vector<1x32xf32> to vector<8x32xf32>
    %99 = arith.addf %95, %98 : vector<8x32xf32>
    %cst_54 = arith.constant dense<0.000000e+00> : vector<8x32xf32>
    %100 = tpu.matmul %53, %92, %cst_54 {dimension_numbers = #tpu.dot_dimension_numbers<[1], [0], [0], [1], [0, 0, 1, 1], [], []>} : vector<8x8xf32>, vector<8x32xf32>, vector<8x32xf32> -> vector<8x32xf32>
    %cst_55 = arith.constant dense<0.000000e+00> : vector<8x32xf32>
    %101 = tpu.matmul %85, %99, %cst_55 {dimension_numbers = #tpu.dot_dimension_numbers<[1], [0], [0], [1], [0, 0, 1, 1], [], []>} : vector<8x8xf32>, vector<8x32xf32>, vector<8x32xf32> -> vector<8x32xf32>
    %c1 = arith.constant 1 : index
    %c0_56 = arith.constant 0 : index
    %c0_57 = arith.constant 0 : index
    %102 = vector.load %arg10[%c1, %c0_56, %c0_57] : memref<4x32x32xf32, #tpu.memory_space<vmem>>, vector<1x32x32xf32>
    %103 = vector.shape_cast %102 : vector<1x32x32xf32> to vector<32x32xf32>
    %cst_58 = arith.constant dense<0.000000e+00> : vector<8x32xf32>
    %104 = tpu.matmul %100, %103, %cst_58 {dimension_numbers = #tpu.dot_dimension_numbers<[1], [0], [0], [1], [0, 0, 1, 1], [], []>} : vector<8x32xf32>, vector<32x32xf32>, vector<8x32xf32> -> vector<8x32xf32>
    %c1_59 = arith.constant 1 : index
    %c0_60 = arith.constant 0 : index
    %c0_61 = arith.constant 0 : index
    %105 = vector.load %arg11[%c1_59, %c0_60, %c0_61] : memref<4x1x32xf32, #tpu.memory_space<vmem>>, vector<1x1x32xf32>
    %106 = vector.shape_cast %105 : vector<1x1x32xf32> to vector<1x32xf32>
    %107 = vector.broadcast %106 : vector<1x32xf32> to vector<8x32xf32>
    %108 = arith.addf %104, %107 : vector<8x32xf32>
    %c1_62 = arith.constant 1 : index
    %c0_63 = arith.constant 0 : index
    %c0_64 = arith.constant 0 : index
    %109 = vector.load %arg12[%c1_62, %c0_63, %c0_64] : memref<4x32x32xf32, #tpu.memory_space<vmem>>, vector<1x32x32xf32>
    %110 = vector.shape_cast %109 : vector<1x32x32xf32> to vector<32x32xf32>
    %cst_65 = arith.constant dense<0.000000e+00> : vector<8x32xf32>
    %111 = tpu.matmul %101, %110, %cst_65 {dimension_numbers = #tpu.dot_dimension_numbers<[1], [0], [0], [1], [0, 0, 1, 1], [], []>} : vector<8x32xf32>, vector<32x32xf32>, vector<8x32xf32> -> vector<8x32xf32>
    %c1_66 = arith.constant 1 : index
    %c0_67 = arith.constant 0 : index
    %c0_68 = arith.constant 0 : index
    %112 = vector.load %arg13[%c1_66, %c0_67, %c0_68] : memref<4x1x32xf32, #tpu.memory_space<vmem>>, vector<1x1x32xf32>
    %113 = vector.shape_cast %112 : vector<1x1x32xf32> to vector<1x32xf32>
    %114 = vector.broadcast %113 : vector<1x32xf32> to vector<8x32xf32>
    %115 = arith.addf %111, %114 : vector<8x32xf32>
    %cst_69 = arith.constant dense<0.000000e+00> : vector<8x32xf32>
    %116 = tpu.matmul %53, %108, %cst_69 {dimension_numbers = #tpu.dot_dimension_numbers<[1], [0], [0], [1], [0, 0, 1, 1], [], []>} : vector<8x8xf32>, vector<8x32xf32>, vector<8x32xf32> -> vector<8x32xf32>
    %cst_70 = arith.constant dense<0.000000e+00> : vector<8x32xf32>
    %117 = tpu.matmul %85, %115, %cst_70 {dimension_numbers = #tpu.dot_dimension_numbers<[1], [0], [0], [1], [0, 0, 1, 1], [], []>} : vector<8x8xf32>, vector<8x32xf32>, vector<8x32xf32> -> vector<8x32xf32>
    %c2 = arith.constant 2 : index
    %c0_71 = arith.constant 0 : index
    %c0_72 = arith.constant 0 : index
    %118 = vector.load %arg10[%c2, %c0_71, %c0_72] : memref<4x32x32xf32, #tpu.memory_space<vmem>>, vector<1x32x32xf32>
    %119 = vector.shape_cast %118 : vector<1x32x32xf32> to vector<32x32xf32>
    %cst_73 = arith.constant dense<0.000000e+00> : vector<8x32xf32>
    %120 = tpu.matmul %116, %119, %cst_73 {dimension_numbers = #tpu.dot_dimension_numbers<[1], [0], [0], [1], [0, 0, 1, 1], [], []>} : vector<8x32xf32>, vector<32x32xf32>, vector<8x32xf32> -> vector<8x32xf32>
    %c2_74 = arith.constant 2 : index
    %c0_75 = arith.constant 0 : index
    %c0_76 = arith.constant 0 : index
    %121 = vector.load %arg11[%c2_74, %c0_75, %c0_76] : memref<4x1x32xf32, #tpu.memory_space<vmem>>, vector<1x1x32xf32>
    %122 = vector.shape_cast %121 : vector<1x1x32xf32> to vector<1x32xf32>
    %123 = vector.broadcast %122 : vector<1x32xf32> to vector<8x32xf32>
    %124 = arith.addf %120, %123 : vector<8x32xf32>
    %c2_77 = arith.constant 2 : index
    %c0_78 = arith.constant 0 : index
    %c0_79 = arith.constant 0 : index
    %125 = vector.load %arg12[%c2_77, %c0_78, %c0_79] : memref<4x32x32xf32, #tpu.memory_space<vmem>>, vector<1x32x32xf32>
    %126 = vector.shape_cast %125 : vector<1x32x32xf32> to vector<32x32xf32>
    %cst_80 = arith.constant dense<0.000000e+00> : vector<8x32xf32>
    %127 = tpu.matmul %117, %126, %cst_80 {dimension_numbers = #tpu.dot_dimension_numbers<[1], [0], [0], [1], [0, 0, 1, 1], [], []>} : vector<8x32xf32>, vector<32x32xf32>, vector<8x32xf32> -> vector<8x32xf32>
    %c2_81 = arith.constant 2 : index
    %c0_82 = arith.constant 0 : index
    %c0_83 = arith.constant 0 : index
    %128 = vector.load %arg13[%c2_81, %c0_82, %c0_83] : memref<4x1x32xf32, #tpu.memory_space<vmem>>, vector<1x1x32xf32>
    %129 = vector.shape_cast %128 : vector<1x1x32xf32> to vector<1x32xf32>
    %130 = vector.broadcast %129 : vector<1x32xf32> to vector<8x32xf32>
    %131 = arith.addf %127, %130 : vector<8x32xf32>
    %cst_84 = arith.constant dense<0.000000e+00> : vector<8x32xf32>
    %132 = tpu.matmul %53, %124, %cst_84 {dimension_numbers = #tpu.dot_dimension_numbers<[1], [0], [0], [1], [0, 0, 1, 1], [], []>} : vector<8x8xf32>, vector<8x32xf32>, vector<8x32xf32> -> vector<8x32xf32>
    %cst_85 = arith.constant dense<0.000000e+00> : vector<8x32xf32>
    %133 = tpu.matmul %85, %131, %cst_85 {dimension_numbers = #tpu.dot_dimension_numbers<[1], [0], [0], [1], [0, 0, 1, 1], [], []>} : vector<8x8xf32>, vector<8x32xf32>, vector<8x32xf32> -> vector<8x32xf32>
    %c3 = arith.constant 3 : index
    %c0_86 = arith.constant 0 : index
    %c0_87 = arith.constant 0 : index
    %134 = vector.load %arg10[%c3, %c0_86, %c0_87] : memref<4x32x32xf32, #tpu.memory_space<vmem>>, vector<1x32x32xf32>
    %135 = vector.shape_cast %134 : vector<1x32x32xf32> to vector<32x32xf32>
    %cst_88 = arith.constant dense<0.000000e+00> : vector<8x32xf32>
    %136 = tpu.matmul %132, %135, %cst_88 {dimension_numbers = #tpu.dot_dimension_numbers<[1], [0], [0], [1], [0, 0, 1, 1], [], []>} : vector<8x32xf32>, vector<32x32xf32>, vector<8x32xf32> -> vector<8x32xf32>
    %c3_89 = arith.constant 3 : index
    %c0_90 = arith.constant 0 : index
    %c0_91 = arith.constant 0 : index
    %137 = vector.load %arg11[%c3_89, %c0_90, %c0_91] : memref<4x1x32xf32, #tpu.memory_space<vmem>>, vector<1x1x32xf32>
    %138 = vector.shape_cast %137 : vector<1x1x32xf32> to vector<1x32xf32>
    %139 = vector.broadcast %138 : vector<1x32xf32> to vector<8x32xf32>
    %140 = arith.addf %136, %139 : vector<8x32xf32>
    %c3_92 = arith.constant 3 : index
    %c0_93 = arith.constant 0 : index
    %c0_94 = arith.constant 0 : index
    %141 = vector.load %arg12[%c3_92, %c0_93, %c0_94] : memref<4x32x32xf32, #tpu.memory_space<vmem>>, vector<1x32x32xf32>
    %142 = vector.shape_cast %141 : vector<1x32x32xf32> to vector<32x32xf32>
    %cst_95 = arith.constant dense<0.000000e+00> : vector<8x32xf32>
    %143 = tpu.matmul %133, %142, %cst_95 {dimension_numbers = #tpu.dot_dimension_numbers<[1], [0], [0], [1], [0, 0, 1, 1], [], []>} : vector<8x32xf32>, vector<32x32xf32>, vector<8x32xf32> -> vector<8x32xf32>
    %c3_96 = arith.constant 3 : index
    %c0_97 = arith.constant 0 : index
    %c0_98 = arith.constant 0 : index
    %144 = vector.load %arg13[%c3_96, %c0_97, %c0_98] : memref<4x1x32xf32, #tpu.memory_space<vmem>>, vector<1x1x32xf32>
    %145 = vector.shape_cast %144 : vector<1x1x32xf32> to vector<1x32xf32>
    %146 = vector.broadcast %145 : vector<1x32xf32> to vector<8x32xf32>
    %147 = arith.addf %143, %146 : vector<8x32xf32>
    %cst_99 = arith.constant dense<0.000000e+00> : vector<8x32xf32>
    %148 = tpu.matmul %53, %140, %cst_99 {dimension_numbers = #tpu.dot_dimension_numbers<[1], [0], [0], [1], [0, 0, 1, 1], [], []>} : vector<8x8xf32>, vector<8x32xf32>, vector<8x32xf32> -> vector<8x32xf32>
    %cst_100 = arith.constant dense<0.000000e+00> : vector<8x32xf32>
    %149 = tpu.matmul %85, %147, %cst_100 {dimension_numbers = #tpu.dot_dimension_numbers<[1], [0], [0], [1], [0, 0, 1, 1], [], []>} : vector<8x8xf32>, vector<8x32xf32>, vector<8x32xf32> -> vector<8x32xf32>
    %c0_101 = arith.constant 0 : index
    %c0_102 = arith.constant 0 : index
    %150 = vector.load %arg14[%c0_101, %c0_102] : memref<32x1xf32, #tpu.memory_space<vmem>>, vector<32x1xf32>
    %cst_103 = arith.constant dense<0.000000e+00> : vector<8x1xf32>
    %151 = tpu.matmul %148, %150, %cst_103 {dimension_numbers = #tpu.dot_dimension_numbers<[1], [0], [0], [1], [0, 0, 1, 1], [], []>} : vector<8x32xf32>, vector<32x1xf32>, vector<8x1xf32> -> vector<8x1xf32>
    %c0_104 = arith.constant 0 : index
    %c0_105 = arith.constant 0 : index
    %152 = vector.load %arg15[%c0_104, %c0_105] : memref<1x1xf32, #tpu.memory_space<vmem>>, vector<1x1xf32>
    %153 = vector.broadcast %152 : vector<1x1xf32> to vector<8x1xf32>
    %154 = arith.addf %151, %153 : vector<8x1xf32>
    %c0_106 = arith.constant 0 : index
    %c0_107 = arith.constant 0 : index
    %155 = vector.load %arg16[%c0_106, %c0_107] : memref<32x1xf32, #tpu.memory_space<vmem>>, vector<32x1xf32>
    %cst_108 = arith.constant dense<0.000000e+00> : vector<8x1xf32>
    %156 = tpu.matmul %149, %155, %cst_108 {dimension_numbers = #tpu.dot_dimension_numbers<[1], [0], [0], [1], [0, 0, 1, 1], [], []>} : vector<8x32xf32>, vector<32x1xf32>, vector<8x1xf32> -> vector<8x1xf32>
    %c0_109 = arith.constant 0 : index
    %c0_110 = arith.constant 0 : index
    %157 = vector.load %arg17[%c0_109, %c0_110] : memref<1x1xf32, #tpu.memory_space<vmem>>, vector<1x1xf32>
    %158 = vector.broadcast %157 : vector<1x1xf32> to vector<8x1xf32>
    %159 = arith.addf %156, %158 : vector<8x1xf32>
    %160 = arith.addf %21, %154 : vector<8x1xf32>
    %161 = arith.addf %160, %159 : vector<8x1xf32>
    %c0_111 = arith.constant 0 : index
    %c0_112 = arith.constant 0 : index
    %162 = vector.load %arg18[%c0_111, %c0_112] : memref<8x1xf32, #tpu.memory_space<vmem>>, vector<8x1xf32>
    tpu.vector_store %arg18[%c0_111, %c0_112], %161 {strides = array<i32>} : memref<8x1xf32, #tpu.memory_space<vmem>>, vector<8x1xf32>,
    return
  }
}

</mosaic_0001>

<llo_original>
// kernel: gcn4_forward.1
$region0: #{gcn4_forward.1}
  #allocation0 [shape = 'u32[]', space=smem, size = 0x4, offset = 0x4, fixed_abs, tag = 'smem constant byte address 0x4 - core index']
  #allocation1 [shape = 'u32[144,128]{1,0:T(1,128)}', space=vmem, size = 0x12000, scoped, tag = 'internal scratch']
  #allocation2 [shape = 'f32[1,1]{1,0:T(1,128)S(1)}', space=vmem, size = 0x200, scoped, tag = 'scoped memory for gcn4_forward.1']
  #allocation3 [shape = 'f32[1,1]{1,0:T(1,128)S(1)}', space=vmem, size = 0x200, scoped, tag = 'scoped memory for gcn4_forward.1']
  #allocation4 [shape = 'f32[1,1]{1,0:T(1,128)S(1)}', space=vmem, size = 0x200, scoped, tag = 'scoped memory for gcn4_forward.1']
  #allocation5 [shape = 'f32[1,1]{1,0:T(1,128)S(1)}', space=vmem, size = 0x200, scoped, tag = 'scoped memory for gcn4_forward.1']
  %s0 = inlined_call_operand.vmem [shape: f32[8,2], index: 0, kind: input, shape index: {}]
  %s1 = inlined_call_operand.vmem [shape: bf16[8,2048], index: 1, kind: input, shape index: {}]
  %s2 = inlined_call_operand.vmem [shape: bf16[8,512], index: 2, kind: input, shape index: {}]
  %s3 = inlined_call_operand.vmem [shape: f32[2,32], index: 3, kind: input, shape index: {}]
  %s4 = inlined_call_operand.vmem [shape: f32[1,32], index: 4, kind: input, shape index: {}]
  %s5 = inlined_call_operand.<no memory space> [shape: f32[1,1], index: 5, kind: input, shape index: {}]
  %s6 = inlined_call_operand.vmem [shape: f32[32,32], index: 6, kind: input, shape index: {}]
  %s7 = inlined_call_operand.vmem [shape: f32[1,32], index: 7, kind: input, shape index: {}]
  %s8 = inlined_call_operand.vmem [shape: f32[32,1], index: 8, kind: input, shape index: {}]
  %s9 = inlined_call_operand.<no memory space> [shape: f32[1,1], index: 9, kind: input, shape index: {}]
  %s10 = inlined_call_operand.vmem [shape: f32[4,32,32], index: 10, kind: input, shape index: {}]
  %s11 = inlined_call_operand.vmem [shape: f32[4,1,32], index: 11, kind: input, shape index: {}]
  %s12 = inlined_call_operand.hbm [shape: f32[4,32,32], index: 12, kind: input, shape index: {}]
  %s13 = inlined_call_operand.vmem [shape: f32[4,1,32], index: 13, kind: input, shape index: {}]
  %s14 = inlined_call_operand.vmem [shape: f32[32,1], index: 14, kind: input, shape index: {}]
  %s15 = inlined_call_operand.<no memory space> [shape: f32[1,1], index: 15, kind: input, shape index: {}]
  %s16 = inlined_call_operand.vmem [shape: f32[32,1], index: 16, kind: input, shape index: {}]
  %s17 = inlined_call_operand.<no memory space> [shape: f32[1,1], index: 17, kind: input, shape index: {}]
  %s18 = inlined_call_operand.vmem [shape: f32[8,1], index: 18, kind: output, shape index: {}]
  %s19 = sld [smem:[#allocation0]]
  $region86: #{gcn4_forward.1} parent=0
    _
  %s21 = ssub.s32 1, %s19
  %s22 = scalar_select 0, %s21, %s19
  %v23 = vstv %s5
  %24 = vst [vmem:[#allocation2] sm:$0x1] %v23
  %v25 = vstv %s9
  %26 = vst [vmem:[#allocation3] sm:$0x1] %v25
  %v27 = vstv %s15
  %28 = vst [vmem:[#allocation4] sm:$0x1] %v27
  %v29 = vstv %s17
  %30 = vst [vmem:[#allocation5] sm:$0x1] %v29
  $region1: #{gcn4_forward.1} parent=0
    #allocation6 [shape = 'u8[65536]{0}', space=vmem, size = 0x10000, scoped, tag = 'input window, operand 12, single buffered']
    #allocation7 [shape = 's32[1]{0}', space=sflag, size = 0x4, scoped, tag = 'scoped memory for gcn4_forward.1']
    %31 = vsyncpa [#allocation7], 0
    // Predicated region
    $region2: #{gcn4_forward.1} parent=1 // pred_check
      _
    $region3: #{gcn4_forward.1} parent=1 // pred_check_branch
      %33 = sbr.rel (0) target = $region5
    $region4: #{gcn4_forward.1} parent=1 // pred_region
      _
    $region5: #{gcn4_forward.1} parent=1 // pred_fallthru
      _
    // Predicated region
    $region6: #{gcn4_forward.1} parent=1 // pred_check
      _
    $region7: #{gcn4_forward.1} parent=1 // pred_check_branch
      %35 = sbr.rel (0) target = $region9
    $region8: #{gcn4_forward.1} parent=1 // pred_region
      _
    $region9: #{gcn4_forward.1} parent=1 // pred_fallthru
      _
    // Predicated region
    $region10: #{gcn4_forward.1} parent=1 // pred_check
      _
    $region11: #{gcn4_forward.1} parent=1 // pred_check_branch
      %37 = sbr.rel (0) target = $region13
    $region12: #{gcn4_forward.1} parent=1 // pred_region
      _
    $region13: #{gcn4_forward.1} parent=1 // pred_fallthru
      _
    // Predicated region
    $region14: #{gcn4_forward.1} parent=1 // pred_check
      _
    $region15: #{gcn4_forward.1} parent=1 // pred_check_branch
      %39 = sbr.rel (0) target = $region17
    $region16: #{gcn4_forward.1} parent=1 // pred_region
      _
    $region17: #{gcn4_forward.1} parent=1 // pred_fallthru
      _
    // Predicated region
    $region18: #{gcn4_forward.1} parent=1 // pred_check
      _
    $region19: #{gcn4_forward.1} parent=1 // pred_check_branch
      %41 = sbr.rel (0) target = $region21
    $region20: #{gcn4_forward.1} parent=1 // pred_region
      _
    $region21: #{gcn4_forward.1} parent=1 // pred_fallthru
      _
    // Predicated region
    $region22: #{gcn4_forward.1} parent=1 // pred_check
      _
    $region23: #{gcn4_forward.1} parent=1 // pred_check_branch
      %43 = sbr.rel (0) target = $region25
    $region24: #{gcn4_forward.1} parent=1 // pred_region
      _
    $region25: #{gcn4_forward.1} parent=1 // pred_fallthru
      _
    // Predicated region
    $region26: #{gcn4_forward.1} parent=1 // pred_check
      _
    $region27: #{gcn4_forward.1} parent=1 // pred_check_branch
      %45 = sbr.rel (0) target = $region29
    $region28: #{gcn4_forward.1} parent=1 // pred_region
      _
    $region29: #{gcn4_forward.1} parent=1 // pred_fallthru
      _
    // Predicated region
    $region30: #{gcn4_forward.1} parent=1 // pred_check
      _
    $region31: #{gcn4_forward.1} parent=1 // pred_check_branch
      %47 = sbr.rel (0) target = $region33
    $region32: #{gcn4_forward.1} parent=1 // pred_region
      _
    $region33: #{gcn4_forward.1} parent=1 // pred_fallthru
      _
    // Predicated region
    $region34: #{gcn4_forward.1} parent=1 // pred_check
      _
    $region35: #{gcn4_forward.1} parent=1 // pred_check_branch
      %49 = sbr.rel (0) target = $region37
    $region36: #{gcn4_forward.1} parent=1 // pred_region
      _
    $region37: #{gcn4_forward.1} parent=1 // pred_fallthru
      _
    // Predicated region
    $region38: #{gcn4_forward.1} parent=1 // pred_check
      _
    $region39: #{gcn4_forward.1} parent=1 // pred_check_branch
      %51 = sbr.rel (0) target = $region41
    $region40: #{gcn4_forward.1} parent=1 // pred_region
      _
    $region41: #{gcn4_forward.1} parent=1 // pred_fallthru
      _
    // Predicated region
    $region42: #{gcn4_forward.1} parent=1 // pred_check
      _
    $region43: #{gcn4_forward.1} parent=1 // pred_check_branch
      %53 = sbr.rel (0) target = $region45
    $region44: #{gcn4_forward.1} parent=1 // pred_region
      _
    $region45: #{gcn4_forward.1} parent=1 // pred_fallthru
      _
    // Predicated region
    $region46: #{gcn4_forward.1} parent=1 // pred_check
      _
    $region47: #{gcn4_forward.1} parent=1 // pred_check_branch
      %55 = sbr.rel (0) target = $region49
    $region48: #{gcn4_forward.1} parent=1 // pred_region
      _
    $region49: #{gcn4_forward.1} parent=1 // pred_fallthru
      _
    // Predicated region
    $region50: #{gcn4_forward.1} parent=1 // pred_check
      _
    $region51: #{gcn4_forward.1} parent=1 // pred_check_branch
      %57 = sbr.rel (0) target = $region53
    $region52: #{gcn4_forward.1} parent=1 // pred_region
      %s59 = ssub.s32 2048, 2048
      %60 = vsyncadd [#allocation7], %s59
      %s61 = sshll.u32 [#allocation6], 4
      %s62 = int_to_ptr.vmem [resolvable:$true] %s61
      %67 = dma.hbm_to_vmem [thread:$0]  %s12, 2048, %s62, [#allocation7], 128, 128, 8
    $region53: #{gcn4_forward.1} parent=1 // pred_fallthru
      _
    // Predicated region
    $region54: #{gcn4_forward.1} parent=1 // pred_check
      _
    $region55: #{gcn4_forward.1} parent=1 // pred_check_branch
      %69 = sbr.rel (0) target = $region57
    $region56: #{gcn4_forward.1} parent=1 // pred_region
      _
    $region57: #{gcn4_forward.1} parent=1 // pred_fallthru
      _
    // Predicated region
    $region58: #{gcn4_forward.1} parent=1 // pred_check
      _
    $region59: #{gcn4_forward.1} parent=1 // pred_check_branch
      %71 = sbr.rel (0) target = $region61
    $region60: #{gcn4_forward.1} parent=1 // pred_region
      _
    $region61: #{gcn4_forward.1} parent=1 // pred_fallthru
      _
    // Predicated region
    $region62: #{gcn4_forward.1} parent=1 // pred_check
      _
    $region63: #{gcn4_forward.1} parent=1 // pred_check_branch
      %73 = sbr.rel (0) target = $region65
    $region64: #{gcn4_forward.1} parent=1 // pred_region
      _
    $region65: #{gcn4_forward.1} parent=1 // pred_fallthru
      _
    // Predicated region
    $region66: #{gcn4_forward.1} parent=1 // pred_check
      _
    $region67: #{gcn4_forward.1} parent=1 // pred_check_branch
      %75 = sbr.rel (0) target = $region69
    $region68: #{gcn4_forward.1} parent=1 // pred_region
      _
    $region69: #{gcn4_forward.1} parent=1 // pred_fallthru
      _
    // Predicated region
    $region70: #{gcn4_forward.1} parent=1 // pred_check
      _
    $region71: #{gcn4_forward.1} parent=1 // pred_check_branch
      %77 = sbr.rel (0) target = $region73
    $region72: #{gcn4_forward.1} parent=1 // pred_region
      _
    $region73: #{gcn4_forward.1} parent=1 // pred_fallthru
      _
    // Predicated region
    $region74: #{gcn4_forward.1} parent=1 // pred_check
      _
    $region75: #{gcn4_forward.1} parent=1 // pred_check_branch
      %79 = sbr.rel (0) target = $region77
    $region76: #{gcn4_forward.1} parent=1 // pred_region
      %80 = dma.done [#allocation7], 2048
    $region77: #{gcn4_forward.1} parent=1 // pred_fallthru
      _
    %v82 = vld [vmem:[%s0] sm:$0xff]
    %v83 = vld [vmem:[%s3] sm:$0x3]
    %v84 = vld [vmem:[%s4] sm:$0x1]
    %v86 = vlaneseq
    %v87 = vshrl.u32 %v86, 7
    %v88 = vsub.s32 0, %v87
    %v89 = vrot.slane %v84, %v88
    %vm91 = vcmask 15360
    %v93 = vsel %vm91, %v82, 0
    %vm95 = vcmask 1041408
    %v97 = vsel %vm95, %v83, 0
    %99 = vmatprep.subr.mxu0 0.0
    %100 = vmatpush1.msra.mxu0 %v97
    %101 = vmatprep.subr.mxu0 0.0
    %102 = vmatpush1.msra.mxu0 0.0
    %103 = vmatprep.subr.mxu0 0.0
    %104 = vmatpush1.msra.mxu0 0.0
    %105 = vmatprep.subr.mxu0 0.0
    %106 = vmatpush1.msra.mxu0 0.0
    %107 = vmatprep.subr.mxu0 0.0
    %108 = vmatpush1.msra.mxu0 0.0
    %109 = vmatprep.subr.mxu0 0.0
    %110 = vmatpush1.msra.mxu0 0.0
    %111 = vmatprep.subr.mxu0 0.0
    %112 = vmatpush1.msra.mxu0 0.0
    %113 = vmatprep.subr.mxu0 0.0
    %114 = vmatpush1.msra.mxu0 0.0
    %115 = vmatprep.subr.mxu0 0.0
    %116 = vmatpush1.msra.mxu0 0.0
    %117 = vmatprep.subr.mxu0 0.0
    %118 = vmatpush1.msra.mxu0 0.0
    %119 = vmatprep.subr.mxu0 0.0
    %120 = vmatpush1.msra.mxu0 0.0
    %121 = vmatprep.subr.mxu0 0.0
    %122 = vmatpush1.msra.mxu0 0.0
    %123 = vmatprep.subr.mxu0 0.0
    %124 = vmatpush1.msra.mxu0 0.0
    %125 = vmatprep.subr.mxu0 0.0
    %126 = vmatpush1.msra.mxu0 0.0
    %127 = vmatprep.subr.mxu0 0.0
    %128 = vmatpush1.msra.mxu0 0.0
    %129 = vmatprep.subr.mxu0 0.0
    %130 = vmatpush1.msra.mxu0 0.0
    %131 = vmatprep.subr.mxu0 0.0
    %132 = vmatpush1.msra.mxu0 0.0
    %133 = vmatprep.subr.mxu0 0.0
    %134 = vmatpush1.msra.mxu0 0.0
    %135 = vmatprep.subr.mxu0 0.0
    %136 = vmatpush1.msra.mxu0 0.0
    %137 = vmatprep.subr.mxu0 0.0
    %138 = vmatpush1.msra.mxu0 0.0
    %139 = vmatprep.subr.mxu0 0.0
    %140 = vmatpush1.msra.mxu0 0.0
    %141 = vmatprep.subr.mxu0 0.0
    %142 = vmatpush1.msra.mxu0 0.0
    %143 = vmatprep.subr.mxu0 0.0
    %144 = vmatpush1.msra.mxu0 0.0
    %145 = vmatprep.subr.mxu0 0.0
    %146 = vmatpush1.msra.mxu0 0.0
    %147 = vmatprep.subr.mxu0 0.0
    %148 = vmatpush1.msra.mxu0 0.0
    %149 = vmatprep.subr.mxu0 0.0
    %150 = vmatpush1.msra.mxu0 0.0
    %151 = vmatprep.subr.mxu0 0.0
    %152 = vmatpush1.msra.mxu0 0.0
    %153 = vmatprep.subr.mxu0 0.0
    %154 = vmatpush1.msra.mxu0 0.0
    %155 = vmatprep.subr.mxu0 0.0
    %156 = vmatpush1.msra.mxu0 0.0
    %157 = vmatprep.subr.mxu0 0.0
    %158 = vmatpush1.msra.mxu0 0.0
    %159 = vmatprep.subr.mxu0 0.0
    %160 = vmatpush1.msra.mxu0 0.0
    %161 = vmatprep.subr.mxu0 0.0
    %162 = vmatpush1.msra.mxu0 0.0
    %163 = vmatprep.mubr.f32.mxu0 0.0
    %164 = vmatmul.mubr.f32.gmra.mrb[0].mxu0 %v93
    %v165 = vpop.f32.mrb[0].mxu0
    %v166 = vadd.f32 %v89, %v165
    %v167 = vpop.f32.mrb[0].mxu0
    %168 = vdwg.mxu0
    %vm169 = vcmp.ge.f32.partialorder %v166, 0.0
    %v170 = vld [vmem:[#allocation2] sm:$0x1]
    %v172 = vlaneseq
    %v173 = vshrl.u32 %v172, 7
    %v174 = vsub.s32 0, %v173
    %v175 = vrot.slane %v170, %v174
    %176 = vset.pattern.permute.xlu0 0
    %177 = vperm.xlu0 %176, %v175
    %v178 = vpop.permute.xlu0 %177
    %v180 = vmul.f32 %v178, %v166
    %v181 = vsel %vm169, %v166, %v180
    %v182 = vld [vmem:[%s6] sm:$0xff]
    %v183 = vld [vmem:[%s6 + $0x8] sm:$0xff]
    %v184 = vld [vmem:[%s6 + $0x10] sm:$0xff]
    %v185 = vld [vmem:[%s6 + $0x18] sm:$0xff]
    %v186 = vld [vmem:[%s7] sm:$0x1]
    %v188 = vlaneseq
    %v189 = vshrl.u32 %v188, 7
    %v190 = vsub.s32 0, %v189
    %v191 = vrot.slane %v186, %v190
    %vm193 = vcmask 261120
    %v195 = vsel %vm193, %v181, 0
    %197 = vmatprep.subr.mxu0 0.0
    %198 = vmatpush1.msra.mxu0 %v182
    %199 = vmatprep.subr.mxu0 0.0
    %200 = vmatpush1.msra.mxu0 %v183
    %201 = vmatprep.subr.mxu0 0.0
    %202 = vmatpush1.msra.mxu0 %v184
    %203 = vmatprep.subr.mxu0 0.0
    %204 = vmatpush1.msra.mxu0 %v185
    %205 = vmatprep.subr.mxu0 0.0
    %206 = vmatpush1.msra.mxu0 0.0
    %207 = vmatprep.subr.mxu0 0.0
    %208 = vmatpush1.msra.mxu0 0.0
    %209 = vmatprep.subr.mxu0 0.0
    %210 = vmatpush1.msra.mxu0 0.0
    %211 = vmatprep.subr.mxu0 0.0
    %212 = vmatpush1.msra.mxu0 0.0
    %213 = vmatprep.subr.mxu0 0.0
    %214 = vmatpush1.msra.mxu0 0.0
    %215 = vmatprep.subr.mxu0 0.0
    %216 = vmatpush1.msra.mxu0 0.0
    %217 = vmatprep.subr.mxu0 0.0
    %218 = vmatpush1.msra.mxu0 0.0
    %219 = vmatprep.subr.mxu0 0.0
    %220 = vmatpush1.msra.mxu0 0.0
    %221 = vmatprep.subr.mxu0 0.0
    %222 = vmatpush1.msra.mxu0 0.0
    %223 = vmatprep.subr.mxu0 0.0
    %224 = vmatpush1.msra.mxu0 0.0
    %225 = vmatprep.subr.mxu0 0.0
    %226 = vmatpush1.msra.mxu0 0.0
    %227 = vmatprep.subr.mxu0 0.0
    %228 = vmatpush1.msra.mxu0 0.0
    %229 = vmatprep.subr.mxu0 0.0
    %230 = vmatpush1.msra.mxu0 0.0
    %231 = vmatprep.subr.mxu0 0.0
    %232 = vmatpush1.msra.mxu0 0.0
    %233 = vmatprep.subr.mxu0 0.0
    %234 = vmatpush1.msra.mxu0 0.0
    %235 = vmatprep.subr.mxu0 0.0
    %236 = vmatpush1.msra.mxu0 0.0
    %237 = vmatprep.subr.mxu0 0.0
    %238 = vmatpush1.msra.mxu0 0.0
    %239 = vmatprep.subr.mxu0 0.0
    %240 = vmatpush1.msra.mxu0 0.0
    %241 = vmatprep.subr.mxu0 0.0
    %242 = vmatpush1.msra.mxu0 0.0
    %243 = vmatprep.subr.mxu0 0.0
    %244 = vmatpush1.msra.mxu0 0.0
    %245 = vmatprep.subr.mxu0 0.0
    %246 = vmatpush1.msra.mxu0 0.0
    %247 = vmatprep.subr.mxu0 0.0
    %248 = vmatpush1.msra.mxu0 0.0
    %249 = vmatprep.subr.mxu0 0.0
    %250 = vmatpush1.msra.mxu0 0.0
    %251 = vmatprep.subr.mxu0 0.0
    %252 = vmatpush1.msra.mxu0 0.0
    %253 = vmatprep.subr.mxu0 0.0
    %254 = vmatpush1.msra.mxu0 0.0
    %255 = vmatprep.subr.mxu0 0.0
    %256 = vmatpush1.msra.mxu0 0.0
    %257 = vmatprep.subr.mxu0 0.0
    %258 = vmatpush1.msra.mxu0 0.0
    %259 = vmatprep.subr.mxu0 0.0
    %260 = vmatpush1.msra.mxu0 0.0
    %261 = vmatprep.mubr.f32.mxu0 0.0
    %262 = vmatmul.mubr.f32.gmra.mrb[0].mxu0 %v195
    %v263 = vpop.f32.mrb[0].mxu0
    %v264 = vadd.f32 %v191, %v263
    %v265 = vpop.f32.mrb[0].mxu0
    %266 = vdwg.mxu0
    %v267 = vld [vmem:[%s8] sm:$0xff]
    %v268 = vld [vmem:[%s8 + $0x8] sm:$0xff]
    %v269 = vld [vmem:[%s8 + $0x10] sm:$0xff]
    %v270 = vld [vmem:[%s8 + $0x18] sm:$0xff]
    %v271 = vld [vmem:[#allocation3] sm:$0x1]
    %v273 = vlaneseq
    %v274 = vshrl.u32 %v273, 7
    %v275 = vsub.s32 0, %v274
    %v276 = vrot.slane %v271, %v275
    %v279 = vsel %vm193, %v264, 0
    %281 = vmatprep.subr.mxu0 0.0
    %282 = vmatpush1.msra.mxu0 %v267
    %283 = vmatprep.subr.mxu0 0.0
    %284 = vmatpush1.msra.mxu0 %v268
    %285 = vmatprep.subr.mxu0 0.0
    %286 = vmatpush1.msra.mxu0 %v269
    %287 = vmatprep.subr.mxu0 0.0
    %288 = vmatpush1.msra.mxu0 %v270
    %289 = vmatprep.subr.mxu0 0.0
    %290 = vmatpush1.msra.mxu0 0.0
    %291 = vmatprep.subr.mxu0 0.0
    %292 = vmatpush1.msra.mxu0 0.0
    %293 = vmatprep.subr.mxu0 0.0
    %294 = vmatpush1.msra.mxu0 0.0
    %295 = vmatprep.subr.mxu0 0.0
    %296 = vmatpush1.msra.mxu0 0.0
    %297 = vmatprep.subr.mxu0 0.0
    %298 = vmatpush1.msra.mxu0 0.0
    %299 = vmatprep.subr.mxu0 0.0
    %300 = vmatpush1.msra.mxu0 0.0
    %301 = vmatprep.subr.mxu0 0.0
    %302 = vmatpush1.msra.mxu0 0.0
    %303 = vmatprep.subr.mxu0 0.0
    %304 = vmatpush1.msra.mxu0 0.0
    %305 = vmatprep.subr.mxu0 0.0
    %306 = vmatpush1.msra.mxu0 0.0
    %307 = vmatprep.subr.mxu0 0.0
    %308 = vmatpush1.msra.mxu0 0.0
    %309 = vmatprep.subr.mxu0 0.0
    %310 = vmatpush1.msra.mxu0 0.0
    %311 = vmatprep.subr.mxu0 0.0
    %312 = vmatpush1.msra.mxu0 0.0
    %313 = vmatprep.subr.mxu0 0.0
    %314 = vmatpush1.msra.mxu0 0.0
    %315 = vmatprep.subr.mxu0 0.0
    %316 = vmatpush1.msra.mxu0 0.0
    %317 = vmatprep.subr.mxu0 0.0
    %318 = vmatpush1.msra.mxu0 0.0
    %319 = vmatprep.subr.mxu0 0.0
    %320 = vmatpush1.msra.mxu0 0.0
    %321 = vmatprep.subr.mxu0 0.0
    %322 = vmatpush1.msra.mxu0 0.0
    %323 = vmatprep.subr.mxu0 0.0
    %324 = vmatpush1.msra.mxu0 0.0
    %325 = vmatprep.subr.mxu0 0.0
    %326 = vmatpush1.msra.mxu0 0.0
    %327 = vmatprep.subr.mxu0 0.0
    %328 = vmatpush1.msra.mxu0 0.0
    %329 = vmatprep.subr.mxu0 0.0
    %330 = vmatpush1.msra.mxu0 0.0
    %331 = vmatprep.subr.mxu0 0.0
    %332 = vmatpush1.msra.mxu0 0.0
    %333 = vmatprep.subr.mxu0 0.0
    %334 = vmatpush1.msra.mxu0 0.0
    %335 = vmatprep.subr.mxu0 0.0
    %336 = vmatpush1.msra.mxu0 0.0
    %337 = vmatprep.subr.mxu0 0.0
    %338 = vmatpush1.msra.mxu0 0.0
    %339 = vmatprep.subr.mxu0 0.0
    %340 = vmatpush1.msra.mxu0 0.0
    %341 = vmatprep.subr.mxu0 0.0
    %342 = vmatpush1.msra.mxu0 0.0
    %343 = vmatprep.subr.mxu0 0.0
    %344 = vmatpush1.msra.mxu0 0.0
    %345 = vmatprep.mubr.f32.mxu0 0.0
    %346 = vmatmul.mubr.f32.gmra.mrb[0].mxu0 %v279
    %v347 = vpop.f32.mrb[0].mxu0
    %v348 = vadd.f32 %v276, %v347
    %v349 = vpop.f32.mrb[0].mxu0
    %350 = vdwg.mxu0
    %v351 = vld [vmem:[%s1] sm:$0xff]
    %v352 = vld [vmem:[%s1 + $0x8] sm:$0xff]
    %v353 = vld [vmem:[%s1 + $0x10] sm:$0xff]
    %v354 = vld [vmem:[%s1 + $0x18] sm:$0xff]
    %v355 = vld [vmem:[%s1 + $0x20] sm:$0xff]
    %v356 = vld [vmem:[%s1 + $0x28] sm:$0xff]
    %v357 = vld [vmem:[%s1 + $0x30] sm:$0xff]
    %v358 = vld [vmem:[%s1 + $0x38] sm:$0xff]
    %v367 = vunpack.c.l.b16 %v351
    %v368 = vunpack.c.h.b16 %v351
    %v369 = vunpack.c.l.b16 %v352
    %v370 = vunpack.c.h.b16 %v352
    %v371 = vunpack.c.l.b16 %v353
    %v372 = vunpack.c.h.b16 %v353
    %v373 = vunpack.c.l.b16 %v354
    %v374 = vunpack.c.h.b16 %v354
    %v375 = vunpack.c.l.b16 %v355
    %v376 = vunpack.c.h.b16 %v355
    %v377 = vunpack.c.l.b16 %v356
    %v378 = vunpack.c.h.b16 %v356
    %v379 = vunpack.c.l.b16 %v357
    %v380 = vunpack.c.h.b16 %v357
    %v381 = vunpack.c.l.b16 %v358
    %v382 = vunpack.c.h.b16 %v358
    %v383 = vpack.c.b16 %v367, %v367
    %v384 = vpack.c.b16 %v368, %v368
    %v385 = vpack.c.b16 %v369, %v369
    %v386 = vpack.c.b16 %v370, %v370
    %v387 = vpack.c.b16 %v371, %v371
    %v388 = vpack.c.b16 %v372, %v372
    %v389 = vpack.c.b16 %v373, %v373
    %v390 = vpack.c.b16 %v374, %v374
    %v391 = vpack.c.b16 %v375, %v375
    %v392 = vpack.c.b16 %v376, %v376
    %v393 = vpack.c.b16 %v377, %v377
    %v394 = vpack.c.b16 %v378, %v378
    %v395 = vpack.c.b16 %v379, %v379
    %v396 = vpack.c.b16 %v380, %v380
    %v397 = vpack.c.b16 %v381, %v381
    %v398 = vpack.c.b16 %v382, %v382
    %415 = vmatprep.subr.bf16.mxu0 %v384
    %416 = vmatpush1.bf16.xpose.msra.mxu0 %v383
    %417 = vmatprep.subr.bf16.mxu0 0
    %418 = vmatpush1.bf16.xpose.msra.mxu0 0
    %419 = vmatprep.subr.bf16.mxu0 0
    %420 = vmatpush1.bf16.xpose.msra.mxu0 0
    %421 = vmatprep.subr.bf16.mxu0 0
    %422 = vmatpush1.bf16.xpose.msra.mxu0 0
    %423 = vmatprep.subr.bf16.mxu0 0
    %424 = vmatpush1.bf16.xpose.msra.mxu0 0
    %425 = vmatprep.subr.bf16.mxu0 0
    %426 = vmatpush1.bf16.xpose.msra.mxu0 0
    %427 = vmatprep.subr.bf16.mxu0 0
    %428 = vmatpush1.bf16.xpose.msra.mxu0 0
    %429 = vmatprep.subr.bf16.mxu0 0
    %430 = vmatpush1.bf16.xpose.msra.mxu0 0
    %431 = vmatprep.subr.bf16.mxu0 0
    %432 = vmatpush1.bf16.xpose.msra.mxu0 0
    %433 = vmatprep.subr.bf16.mxu0 0
    %434 = vmatpush1.bf16.xpose.msra.mxu0 0
    %435 = vmatprep.subr.bf16.mxu0 0
    %436 = vmatpush1.bf16.xpose.msra.mxu0 0
    %437 = vmatprep.subr.bf16.mxu0 0
    %438 = vmatpush1.bf16.xpose.msra.mxu0 0
    %439 = vmatprep.subr.bf16.mxu0 0
    %440 = vmatpush1.bf16.xpose.msra.mxu0 0
    %441 = vmatprep.subr.bf16.mxu0 0
    %442 = vmatpush1.bf16.xpose.msra.mxu0 0
    %443 = vmatprep.subr.bf16.mxu0 0
    %444 = vmatpush1.bf16.xpose.msra.mxu0 0
    %445 = vmatprep.subr.bf16.mxu0 0
    %446 = vmatpush1.bf16.xpose.msra.mxu0 0
    %447 = vmatprep.mubr.bf16.mxu0 %v384
    %448 = vmatmul.mubr.bf16.gmra.mrb[0].mxu0 %v383
    %v449 = vpop.f32.mrb[0].mxu0
    %v450 = vadd.f32 0.0, %v449
    %v451 = vpop.f32.mrb[0].mxu0
    %v452 = vpop.f32.mrb[0].mxu0
    %v453 = vpop.f32.mrb[0].mxu0
    %454 = vdwg.mxu0
    %455 = vmatprep.subr.bf16.mxu0 %v386
    %456 = vmatpush1.bf16.xpose.msra.mxu0 %v385
    %457 = vmatprep.subr.bf16.mxu0 0
    %458 = vmatpush1.bf16.xpose.msra.mxu0 0
    %459 = vmatprep.subr.bf16.mxu0 0
    %460 = vmatpush1.bf16.xpose.msra.mxu0 0
    %461 = vmatprep.subr.bf16.mxu0 0
    %462 = vmatpush1.bf16.xpose.msra.mxu0 0
    %463 = vmatprep.subr.bf16.mxu0 0
    %464 = vmatpush1.bf16.xpose.msra.mxu0 0
    %465 = vmatprep.subr.bf16.mxu0 0
    %466 = vmatpush1.bf16.xpose.msra.mxu0 0
    %467 = vmatprep.subr.bf16.mxu0 0
    %468 = vmatpush1.bf16.xpose.msra.mxu0 0
    %469 = vmatprep.subr.bf16.mxu0 0
    %470 = vmatpush1.bf16.xpose.msra.mxu0 0
    %471 = vmatprep.subr.bf16.mxu0 0
    %472 = vmatpush1.bf16.xpose.msra.mxu0 0
    %473 = vmatprep.subr.bf16.mxu0 0
    %474 = vmatpush1.bf16.xpose.msra.mxu0 0
    %475 = vmatprep.subr.bf16.mxu0 0
    %476 = vmatpush1.bf16.xpose.msra.mxu0 0
    %477 = vmatprep.subr.bf16.mxu0 0
    %478 = vmatpush1.bf16.xpose.msra.mxu0 0
    %479 = vmatprep.subr.bf16.mxu0 0
    %480 = vmatpush1.bf16.xpose.msra.mxu0 0
    %481 = vmatprep.subr.bf16.mxu0 0
    %482 = vmatpush1.bf16.xpose.msra.mxu0 0
    %483 = vmatprep.subr.bf16.mxu0 0
    %484 = vmatpush1.bf16.xpose.msra.mxu0 0
    %485 = vmatprep.subr.bf16.mxu0 0
    %486 = vmatpush1.bf16.xpose.msra.mxu0 0
    %487 = vmatprep.mubr.bf16.mxu0 %v386
    %488 = vmatmul.mubr.bf16.gmra.mrb[0].mxu0 %v385
    %v489 = vpop.f32.mrb[0].mxu0
    %v490 = vadd.f32 %v450, %v489
    %v491 = vpop.f32.mrb[0].mxu0
    %v492 = vpop.f32.mrb[0].mxu0
    %v493 = vpop.f32.mrb[0].mxu0
    %494 = vdwg.mxu0
    %495 = vmatprep.subr.bf16.mxu0 %v388
    %496 = vmatpush1.bf16.xpose.msra.mxu0 %v387
    %497 = vmatprep.subr.bf16.mxu0 0
    %498 = vmatpush1.bf16.xpose.msra.mxu0 0
    %499 = vmatprep.subr.bf16.mxu0 0
    %500 = vmatpush1.bf16.xpose.msra.mxu0 0
    %501 = vmatprep.subr.bf16.mxu0 0
    %502 = vmatpush1.bf16.xpose.msra.mxu0 0
    %503 = vmatprep.subr.bf16.mxu0 0
    %504 = vmatpush1.bf16.xpose.msra.mxu0 0
    %505 = vmatprep.subr.bf16.mxu0 0
    %506 = vmatpush1.bf16.xpose.msra.mxu0 0
    %507 = vmatprep.subr.bf16.mxu0 0
    %508 = vmatpush1.bf16.xpose.msra.mxu0 0
    %509 = vmatprep.subr.bf16.mxu0 0
    %510 = vmatpush1.bf16.xpose.msra.mxu0 0
    %511 = vmatprep.subr.bf16.mxu0 0
    %512 = vmatpush1.bf16.xpose.msra.mxu0 0
    %513 = vmatprep.subr.bf16.mxu0 0
    %514 = vmatpush1.bf16.xpose.msra.mxu0 0
    %515 = vmatprep.subr.bf16.mxu0 0
    %516 = vmatpush1.bf16.xpose.msra.mxu0 0
    %517 = vmatprep.subr.bf16.mxu0 0
    %518 = vmatpush1.bf16.xpose.msra.mxu0 0
    %519 = vmatprep.subr.bf16.mxu0 0
    %520 = vmatpush1.bf16.xpose.msra.mxu0 0
    %521 = vmatprep.subr.bf16.mxu0 0
    %522 = vmatpush1.bf16.xpose.msra.mxu0 0
    %523 = vmatprep.subr.bf16.mxu0 0
    %524 = vmatpush1.bf16.xpose.msra.mxu0 0
    %525 = vmatprep.subr.bf16.mxu0 0
    %526 = vmatpush1.bf16.xpose.msra.mxu0 0
    %527 = vmatprep.mubr.bf16.mxu0 %v388
    %528 = vmatmul.mubr.bf16.gmra.mrb[0].mxu0 %v387
    %v529 = vpop.f32.mrb[0].mxu0
    %v530 = vadd.f32 %v490, %v529
    %v531 = vpop.f32.mrb[0].mxu0
    %v532 = vpop.f32.mrb[0].mxu0
    %v533 = vpop.f32.mrb[0].mxu0
    %534 = vdwg.mxu0
    %535 = vmatprep.subr.bf16.mxu0 %v390
    %536 = vmatpush1.bf16.xpose.msra.mxu0 %v389
    %537 = vmatprep.subr.bf16.mxu0 0
    %538 = vmatpush1.bf16.xpose.msra.mxu0 0
    %539 = vmatprep.subr.bf16.mxu0 0
    %540 = vmatpush1.bf16.xpose.msra.mxu0 0
    %541 = vmatprep.subr.bf16.mxu0 0
    %542 = vmatpush1.bf16.xpose.msra.mxu0 0
    %543 = vmatprep.subr.bf16.mxu0 0
    %544 = vmatpush1.bf16.xpose.msra.mxu0 0
    %545 = vmatprep.subr.bf16.mxu0 0
    %546 = vmatpush1.bf16.xpose.msra.mxu0 0
    %547 = vmatprep.subr.bf16.mxu0 0
    %548 = vmatpush1.bf16.xpose.msra.mxu0 0
    %549 = vmatprep.subr.bf16.mxu0 0
    %550 = vmatpush1.bf16.xpose.msra.mxu0 0
    %551 = vmatprep.subr.bf16.mxu0 0
    %552 = vmatpush1.bf16.xpose.msra.mxu0 0
    %553 = vmatprep.subr.bf16.mxu0 0
    %554 = vmatpush1.bf16.xpose.msra.mxu0 0
    %555 = vmatprep.subr.bf16.mxu0 0
    %556 = vmatpush1.bf16.xpose.msra.mxu0 0
    %557 = vmatprep.subr.bf16.mxu0 0
    %558 = vmatpush1.bf16.xpose.msra.mxu0 0
    %559 = vmatprep.subr.bf16.mxu0 0
    %560 = vmatpush1.bf16.xpose.msra.mxu0 0
    %561 = vmatprep.subr.bf16.mxu0 0
    %562 = vmatpush1.bf16.xpose.msra.mxu0 0
    %563 = vmatprep.subr.bf16.mxu0 0
    %564 = vmatpush1.bf16.xpose.msra.mxu0 0
    %565 = vmatprep.subr.bf16.mxu0 0
    %566 = vmatpush1.bf16.xpose.msra.mxu0 0
    %567 = vmatprep.mubr.bf16.mxu0 %v390
    %568 = vmatmul.mubr.bf16.gmra.mrb[0].mxu0 %v389
    %v569 = vpop.f32.mrb[0].mxu0
    %v570 = vadd.f32 %v530, %v569
    %v571 = vpop.f32.mrb[0].mxu0
    %v572 = vpop.f32.mrb[0].mxu0
    %v573 = vpop.f32.mrb[0].mxu0
    %574 = vdwg.mxu0
    %575 = vmatprep.subr.bf16.mxu0 %v392
    %576 = vmatpush1.bf16.xpose.msra.mxu0 %v391
    %577 = vmatprep.subr.bf16.mxu0 0
    %578 = vmatpush1.bf16.xpose.msra.mxu0 0
    %579 = vmatprep.subr.bf16.mxu0 0
    %580 = vmatpush1.bf16.xpose.msra.mxu0 0
    %581 = vmatprep.subr.bf16.mxu0 0
    %582 = vmatpush1.bf16.xpose.msra.mxu0 0
    %583 = vmatprep.subr.bf16.mxu0 0
    %584 = vmatpush1.bf16.xpose.msra.mxu0 0
    %585 = vmatprep.subr.bf16.mxu0 0
    %586 = vmatpush1.bf16.xpose.msra.mxu0 0
    %587 = vmatprep.subr.bf16.mxu0 0
    %588 = vmatpush1.bf16.xpose.msra.mxu0 0
    %589 = vmatprep.subr.bf16.mxu0 0
    %590 = vmatpush1.bf16.xpose.msra.mxu0 0
    %591 = vmatprep.subr.bf16.mxu0 0
    %592 = vmatpush1.bf16.xpose.msra.mxu0 0
    %593 = vmatprep.subr.bf16.mxu0 0
    %594 = vmatpush1.bf16.xpose.msra.mxu0 0
    %595 = vmatprep.subr.bf16.mxu0 0
    %596 = vmatpush1.bf16.xpose.msra.mxu0 0
    %597 = vmatprep.subr.bf16.mxu0 0
    %598 = vmatpush1.bf16.xpose.msra.mxu0 0
    %599 = vmatprep.subr.bf16.mxu0 0
    %600 = vmatpush1.bf16.xpose.msra.mxu0 0
    %601 = vmatprep.subr.bf16.mxu0 0
    %602 = vmatpush1.bf16.xpose.msra.mxu0 0
    %603 = vmatprep.subr.bf16.mxu0 0
    %604 = vmatpush1.bf16.xpose.msra.mxu0 0
    %605 = vmatprep.subr.bf16.mxu0 0
    %606 = vmatpush1.bf16.xpose.msra.mxu0 0
    %607 = vmatprep.mubr.bf16.mxu0 %v392
    %608 = vmatmul.mubr.bf16.gmra.mrb[0].mxu0 %v391
    %v609 = vpop.f32.mrb[0].mxu0
    %v610 = vadd.f32 %v570, %v609
    %v611 = vpop.f32.mrb[0].mxu0
    %v612 = vpop.f32.mrb[0].mxu0
    %v613 = vpop.f32.mrb[0].mxu0
    %614 = vdwg.mxu0
    %615 = vmatprep.subr.bf16.mxu0 %v394
    %616 = vmatpush1.bf16.xpose.msra.mxu0 %v393
    %617 = vmatprep.subr.bf16.mxu0 0
    %618 = vmatpush1.bf16.xpose.msra.mxu0 0
    %619 = vmatprep.subr.bf16.mxu0 0
    %620 = vmatpush1.bf16.xpose.msra.mxu0 0
    %621 = vmatprep.subr.bf16.mxu0 0
    %622 = vmatpush1.bf16.xpose.msra.mxu0 0
    %623 = vmatprep.subr.bf16.mxu0 0
    %624 = vmatpush1.bf16.xpose.msra.mxu0 0
    %625 = vmatprep.subr.bf16.mxu0 0
    %626 = vmatpush1.bf16.xpose.msra.mxu0 0
    %627 = vmatprep.subr.bf16.mxu0 0
    %628 = vmatpush1.bf16.xpose.msra.mxu0 0
    %629 = vmatprep.subr.bf16.mxu0 0
    %630 = vmatpush1.bf16.xpose.msra.mxu0 0
    %631 = vmatprep.subr.bf16.mxu0 0
    %632 = vmatpush1.bf16.xpose.msra.mxu0 0
    %633 = vmatprep.subr.bf16.mxu0 0
    %634 = vmatpush1.bf16.xpose.msra.mxu0 0
    %635 = vmatprep.subr.bf16.mxu0 0
    %636 = vmatpush1.bf16.xpose.msra.mxu0 0
    %637 = vmatprep.subr.bf16.mxu0 0
    %638 = vmatpush1.bf16.xpose.msra.mxu0 0
    %639 = vmatprep.subr.bf16.mxu0 0
    %640 = vmatpush1.bf16.xpose.msra.mxu0 0
    %641 = vmatprep.subr.bf16.mxu0 0
    %642 = vmatpush1.bf16.xpose.msra.mxu0 0
    %643 = vmatprep.subr.bf16.mxu0 0
    %644 = vmatpush1.bf16.xpose.msra.mxu0 0
    %645 = vmatprep.subr.bf16.mxu0 0
    %646 = vmatpush1.bf16.xpose.msra.mxu0 0
    %647 = vmatprep.mubr.bf16.mxu0 %v394
    %648 = vmatmul.mubr.bf16.gmra.mrb[0].mxu0 %v393
    %v649 = vpop.f32.mrb[0].mxu0
    %v650 = vadd.f32 %v610, %v649
    %v651 = vpop.f32.mrb[0].mxu0
    %v652 = vpop.f32.mrb[0].mxu0
    %v653 = vpop.f32.mrb[0].mxu0
    %654 = vdwg.mxu0
    %655 = vmatprep.subr.bf16.mxu0 %v396
    %656 = vmatpush1.bf16.xpose.msra.mxu0 %v395
    %657 = vmatprep.subr.bf16.mxu0 0
    %658 = vmatpush1.bf16.xpose.msra.mxu0 0
    %659 = vmatprep.subr.bf16.mxu0 0
    %660 = vmatpush1.bf16.xpose.msra.mxu0 0
    %661 = vmatprep.subr.bf16.mxu0 0
    %662 = vmatpush1.bf16.xpose.msra.mxu0 0
    %663 = vmatprep.subr.bf16.mxu0 0
    %664 = vmatpush1.bf16.xpose.msra.mxu0 0
    %665 = vmatprep.subr.bf16.mxu0 0
    %666 = vmatpush1.bf16.xpose.msra.mxu0 0
    %667 = vmatprep.subr.bf16.mxu0 0
    %668 = vmatpush1.bf16.xpose.msra.mxu0 0
    %669 = vmatprep.subr.bf16.mxu0 0
    %670 = vmatpush1.bf16.xpose.msra.mxu0 0
    %671 = vmatprep.subr.bf16.mxu0 0
    %672 = vmatpush1.bf16.xpose.msra.mxu0 0
    %673 = vmatprep.subr.bf16.mxu0 0
    %674 = vmatpush1.bf16.xpose.msra.mxu0 0
    %675 = vmatprep.subr.bf16.mxu0 0
    %676 = vmatpush1.bf16.xpose.msra.mxu0 0
    %677 = vmatprep.subr.bf16.mxu0 0
    %678 = vmatpush1.bf16.xpose.msra.mxu0 0
    %679 = vmatprep.subr.bf16.mxu0 0
    %680 = vmatpush1.bf16.xpose.msra.mxu0 0
    %681 = vmatprep.subr.bf16.mxu0 0
    %682 = vmatpush1.bf16.xpose.msra.mxu0 0
    %683 = vmatprep.subr.bf16.mxu0 0
    %684 = vmatpush1.bf16.xpose.msra.mxu0 0
    %685 = vmatprep.subr.bf16.mxu0 0
    %686 = vmatpush1.bf16.xpose.msra.mxu0 0
    %687 = vmatprep.mubr.bf16.mxu0 %v396
    %688 = vmatmul.mubr.bf16.gmra.mrb[0].mxu0 %v395
    %v689 = vpop.f32.mrb[0].mxu0
    %v690 = vadd.f32 %v650, %v689
    %v691 = vpop.f32.mrb[0].mxu0
    %v692 = vpop.f32.mrb[0].mxu0
    %v693 = vpop.f32.mrb[0].mxu0
    %694 = vdwg.mxu0
    %695 = vmatprep.subr.bf16.mxu0 %v398
    %696 = vmatpush1.bf16.xpose.msra.mxu0 %v397
    %697 = vmatprep.subr.bf16.mxu0 0
    %698 = vmatpush1.bf16.xpose.msra.mxu0 0
    %699 = vmatprep.subr.bf16.mxu0 0
    %700 = vmatpush1.bf16.xpose.msra.mxu0 0
    %701 = vmatprep.subr.bf16.mxu0 0
    %702 = vmatpush1.bf16.xpose.msra.mxu0 0
    %703 = vmatprep.subr.bf16.mxu0 0
    %704 = vmatpush1.bf16.xpose.msra.mxu0 0
    %705 = vmatprep.subr.bf16.mxu0 0
    %706 = vmatpush1.bf16.xpose.msra.mxu0 0
    %707 = vmatprep.subr.bf16.mxu0 0
    %708 = vmatpush1.bf16.xpose.msra.mxu0 0
    %709 = vmatprep.subr.bf16.mxu0 0
    %710 = vmatpush1.bf16.xpose.msra.mxu0 0
    %711 = vmatprep.subr.bf16.mxu0 0
    %712 = vmatpush1.bf16.xpose.msra.mxu0 0
    %713 = vmatprep.subr.bf16.mxu0 0
    %714 = vmatpush1.bf16.xpose.msra.mxu0 0
    %715 = vmatprep.subr.bf16.mxu0 0
    %716 = vmatpush1.bf16.xpose.msra.mxu0 0
    %717 = vmatprep.subr.bf16.mxu0 0
    %718 = vmatpush1.bf16.xpose.msra.mxu0 0
    %719 = vmatprep.subr.bf16.mxu0 0
    %720 = vmatpush1.bf16.xpose.msra.mxu0 0
    %721 = vmatprep.subr.bf16.mxu0 0
    %722 = vmatpush1.bf16.xpose.msra.mxu0 0
    %723 = vmatprep.subr.bf16.mxu0 0
    %724 = vmatpush1.bf16.xpose.msra.mxu0 0
    %725 = vmatprep.subr.bf16.mxu0 0
    %726 = vmatpush1.bf16.xpose.msra.mxu0 0
    %727 = vmatprep.mubr.bf16.mxu0 %v398
    %728 = vmatmul.mubr.bf16.gmra.mrb[0].mxu0 %v397
    %v729 = vpop.f32.mrb[0].mxu0
    %v730 = vadd.f32 %v690, %v729
    %v731 = vpop.f32.mrb[0].mxu0
    %v732 = vpop.f32.mrb[0].mxu0
    %v733 = vpop.f32.mrb[0].mxu0
    %734 = vdwg.mxu0
    %v735 = vlaneseq
    %v736 = vshrl.u32 %v735, 7
    %v737 = vlaneseq
    %v738 = vand.u32 %v737, 127
    %vm739 = vcmp.eq.s32.totalorder %v736, %v738
    %v740 = vsel %vm739, %v730, 0.0
    %vm741 = vcmask 64512
    %v742 = vsel %vm741, %v740, 0.0
    %743 = vadd.xlane.f32.xlu0 %v742
    %v744 = vpop.xlane.xlu0 %743
    %v745 = vrot.slane %v742, 4
    %v746 = vadd.f32 %v742, %v745
    %v747 = vrot.slane %v746, 2
    %v748 = vadd.f32 %v746, %v747
    %v749 = vrot.slane %v748, 1
    %v750 = vadd.f32 %v748, %v749
    %v751 = vmax.f32 %v744, 1e-12
    %v752 = vrsqrt.pop %v751
    %v753 = vmax.f32 %v750, 1e-12
    %v754 = vrsqrt.pop %v753
    %v755 = vmul.f32 %v730, %v752
    %v756 = vmul.f32 %v755, %v754
    %v757 = vsel %vm741, %v756, -inf
    %758 = vmax.xlane.f32.xlu0 %v757
    %v759 = vpop.xlane.xlu0 %758
    %v760 = vsub.f32 %v756, %v759
    %v761 = vmul.f32 %v760, 1.442695
    %v762 = vpow.pop %v761
    %v763 = vsel %vm741, %v762, 0.0
    %764 = vadd.xlane.f32.xlu0 %v763
    %v765 = vpop.xlane.xlu0 %764
    %v766 = vrcp.pop %v765
    %v767 = vmul.f32 %v762, %v766
    %v768 = vld [vmem:[%s2] sm:$0xff]
    %v769 = vld [vmem:[%s2 + $0x8] sm:$0xff]
    %v772 = vunpack.c.l.b16 %v768
    %v773 = vunpack.c.h.b16 %v768
    %v774 = vunpack.c.l.b16 %v769
    %v775 = vunpack.c.h.b16 %v769
    %v776 = vpack.c.b16 %v772, %v772
    %v777 = vpack.c.b16 %v773, %v773
    %v778 = vpack.c.b16 %v774, %v774
    %v779 = vpack.c.b16 %v775, %v775
    %784 = vmatprep.subr.bf16.mxu0 %v777
    %785 = vmatpush1.bf16.xpose.msra.mxu0 %v776
    %786 = vmatprep.subr.bf16.mxu0 0
    %787 = vmatpush1.bf16.xpose.msra.mxu0 0
    %788 = vmatprep.subr.bf16.mxu0 0
    %789 = vmatpush1.bf16.xpose.msra.mxu0 0
    %790 = vmatprep.subr.bf16.mxu0 0
    %791 = vmatpush1.bf16.xpose.msra.mxu0 0
    %792 = vmatprep.subr.bf16.mxu0 0
    %793 = vmatpush1.bf16.xpose.msra.mxu0 0
    %794 = vmatprep.subr.bf16.mxu0 0
    %795 = vmatpush1.bf16.xpose.msra.mxu0 0
    %796 = vmatprep.subr.bf16.mxu0 0
    %797 = vmatpush1.bf16.xpose.msra.mxu0 0
    %798 = vmatprep.subr.bf16.mxu0 0
    %799 = vmatpush1.bf16.xpose.msra.mxu0 0
    %800 = vmatprep.subr.bf16.mxu0 0
    %801 = vmatpush1.bf16.xpose.msra.mxu0 0
    %802 = vmatprep.subr.bf16.mxu0 0
    %803 = vmatpush1.bf16.xpose.msra.mxu0 0
    %804 = vmatprep.subr.bf16.mxu0 0
    %805 = vmatpush1.bf16.xpose.msra.mxu0 0
    %806 = vmatprep.subr.bf16.mxu0 0
    %807 = vmatpush1.bf16.xpose.msra.mxu0 0
    %808 = vmatprep.subr.bf16.mxu0 0
    %809 = vmatpush1.bf16.xpose.msra.mxu0 0
    %810 = vmatprep.subr.bf16.mxu0 0
    %811 = vmatpush1.bf16.xpose.msra.mxu0 0
    %812 = vmatprep.subr.bf16.mxu0 0
    %813 = vmatpush1.bf16.xpose.msra.mxu0 0
    %814 = vmatprep.subr.bf16.mxu0 0
    %815 = vmatpush1.bf16.xpose.msra.mxu0 0
    %816 = vmatprep.mubr.bf16.mxu0 %v777
    %817 = vmatmul.mubr.bf16.gmra.mrb[0].mxu0 %v776
    %v818 = vpop.f32.mrb[0].mxu0
    %v819 = vadd.f32 0.0, %v818
    %v820 = vpop.f32.mrb[0].mxu0
    %v821 = vpop.f32.mrb[0].mxu0
    %v822 = vpop.f32.mrb[0].mxu0
    %823 = vdwg.mxu0
    %824 = vmatprep.subr.bf16.mxu0 %v779
    %825 = vmatpush1.bf16.xpose.msra.mxu0 %v778
    %826 = vmatprep.subr.bf16.mxu0 0
    %827 = vmatpush1.bf16.xpose.msra.mxu0 0
    %828 = vmatprep.subr.bf16.mxu0 0
    %829 = vmatpush1.bf16.xpose.msra.mxu0 0
    %830 = vmatprep.subr.bf16.mxu0 0
    %831 = vmatpush1.bf16.xpose.msra.mxu0 0
    %832 = vmatprep.subr.bf16.mxu0 0
    %833 = vmatpush1.bf16.xpose.msra.mxu0 0
    %834 = vmatprep.subr.bf16.mxu0 0
    %835 = vmatpush1.bf16.xpose.msra.mxu0 0
    %836 = vmatprep.subr.bf16.mxu0 0
    %837 = vmatpush1.bf16.xpose.msra.mxu0 0
    %838 = vmatprep.subr.bf16.mxu0 0
    %839 = vmatpush1.bf16.xpose.msra.mxu0 0
    %840 = vmatprep.subr.bf16.mxu0 0
    %841 = vmatpush1.bf16.xpose.msra.mxu0 0
    %842 = vmatprep.subr.bf16.mxu0 0
    %843 = vmatpush1.bf16.xpose.msra.mxu0 0
    %844 = vmatprep.subr.bf16.mxu0 0
    %845 = vmatpush1.bf16.xpose.msra.mxu0 0
    %846 = vmatprep.subr.bf16.mxu0 0
    %847 = vmatpush1.bf16.xpose.msra.mxu0 0
    %848 = vmatprep.subr.bf16.mxu0 0
    %849 = vmatpush1.bf16.xpose.msra.mxu0 0
    %850 = vmatprep.subr.bf16.mxu0 0
    %851 = vmatpush1.bf16.xpose.msra.mxu0 0
    %852 = vmatprep.subr.bf16.mxu0 0
    %853 = vmatpush1.bf16.xpose.msra.mxu0 0
    %854 = vmatprep.subr.bf16.mxu0 0
    %855 = vmatpush1.bf16.xpose.msra.mxu0 0
    %856 = vmatprep.mubr.bf16.mxu0 %v779
    %857 = vmatmul.mubr.bf16.gmra.mrb[0].mxu0 %v778
    %v858 = vpop.f32.mrb[0].mxu0
    %v859 = vadd.f32 %v819, %v858
    %v860 = vpop.f32.mrb[0].mxu0
    %v861 = vpop.f32.mrb[0].mxu0
    %v862 = vpop.f32.mrb[0].mxu0
    %863 = vdwg.mxu0
    %v864 = vsel %vm739, %v859, 0.0
    %v865 = vsel %vm741, %v864, 0.0
    %866 = vadd.xlane.f32.xlu0 %v865
    %v867 = vpop.xlane.xlu0 %866
    %v868 = vrot.slane %v865, 4
    %v869 = vadd.f32 %v865, %v868
    %v870 = vrot.slane %v869, 2
    %v871 = vadd.f32 %v869, %v870
    %v872 = vrot.slane %v871, 1
    %v873 = vadd.f32 %v871, %v872
    %v874 = vmax.f32 %v867, 1e-12
    %v875 = vrsqrt.pop %v874
    %v876 = vmax.f32 %v873, 1e-12
    %v877 = vrsqrt.pop %v876
    %v878 = vmul.f32 %v859, %v875
    %v879 = vmul.f32 %v878, %v877
    %v880 = vsel %vm741, %v879, -inf
    %881 = vmax.xlane.f32.xlu0 %v880
    %v882 = vpop.xlane.xlu0 %881
    %v883 = vsub.f32 %v879, %v882
    %v884 = vmul.f32 %v883, 1.442695
    %v885 = vpow.pop %v884
    %v886 = vsel %vm741, %v885, 0.0
    %887 = vadd.xlane.f32.xlu0 %v886
    %v888 = vpop.xlane.xlu0 %887
    %v889 = vrcp.pop %v888
    %v890 = vmul.f32 %v885, %v889
    %v891 = vld [vmem:[%s10] sm:$0xff]
    %v892 = vld [vmem:[%s10 + $0x8] sm:$0xff]
    %v893 = vld [vmem:[%s10 + $0x10] sm:$0xff]
    %v894 = vld [vmem:[%s10 + $0x18] sm:$0xff]
    %v895 = vld [vmem:[%s11] sm:$0x1]
    %v897 = vlaneseq
    %v898 = vshrl.u32 %v897, 7
    %v899 = vsub.s32 0, %v898
    %v900 = vrot.slane %v895, %v899
    %902 = vmatprep.subr.mxu0 0.0
    %903 = vmatpush1.msra.mxu0 %v891
    %904 = vmatprep.subr.mxu0 0.0
    %905 = vmatpush1.msra.mxu0 %v892
    %906 = vmatprep.subr.mxu0 0.0
    %907 = vmatpush1.msra.mxu0 %v893
    %908 = vmatprep.subr.mxu0 0.0
    %909 = vmatpush1.msra.mxu0 %v894
    %910 = vmatprep.subr.mxu0 0.0
    %911 = vmatpush1.msra.mxu0 0.0
    %912 = vmatprep.subr.mxu0 0.0
    %913 = vmatpush1.msra.mxu0 0.0
    %914 = vmatprep.subr.mxu0 0.0
    %915 = vmatpush1.msra.mxu0 0.0
    %916 = vmatprep.subr.mxu0 0.0
    %917 = vmatpush1.msra.mxu0 0.0
    %918 = vmatprep.subr.mxu0 0.0
    %919 = vmatpush1.msra.mxu0 0.0
    %920 = vmatprep.subr.mxu0 0.0
    %921 = vmatpush1.msra.mxu0 0.0
    %922 = vmatprep.subr.mxu0 0.0
    %923 = vmatpush1.msra.mxu0 0.0
    %924 = vmatprep.subr.mxu0 0.0
    %925 = vmatpush1.msra.mxu0 0.0
    %926 = vmatprep.subr.mxu0 0.0
    %927 = vmatpush1.msra.mxu0 0.0
    %928 = vmatprep.subr.mxu0 0.0
    %929 = vmatpush1.msra.mxu0 0.0
    %930 = vmatprep.subr.mxu0 0.0
    %931 = vmatpush1.msra.mxu0 0.0
    %932 = vmatprep.subr.mxu0 0.0
    %933 = vmatpush1.msra.mxu0 0.0
    %934 = vmatprep.subr.mxu0 0.0
    %935 = vmatpush1.msra.mxu0 0.0
    %936 = vmatprep.subr.mxu0 0.0
    %937 = vmatpush1.msra.mxu0 0.0
    %938 = vmatprep.subr.mxu0 0.0
    %939 = vmatpush1.msra.mxu0 0.0
    %940 = vmatprep.subr.mxu0 0.0
    %941 = vmatpush1.msra.mxu0 0.0
    %942 = vmatprep.subr.mxu0 0.0
    %943 = vmatpush1.msra.mxu0 0.0
    %944 = vmatprep.subr.mxu0 0.0
    %945 = vmatpush1.msra.mxu0 0.0
    %946 = vmatprep.subr.mxu0 0.0
    %947 = vmatpush1.msra.mxu0 0.0
    %948 = vmatprep.subr.mxu0 0.0
    %949 = vmatpush1.msra.mxu0 0.0
    %950 = vmatprep.subr.mxu0 0.0
    %951 = vmatpush1.msra.mxu0 0.0
    %952 = vmatprep.subr.mxu0 0.0
    %953 = vmatpush1.msra.mxu0 0.0
    %954 = vmatprep.subr.mxu0 0.0
    %955 = vmatpush1.msra.mxu0 0.0
    %956 = vmatprep.subr.mxu0 0.0
    %957 = vmatpush1.msra.mxu0 0.0
    %958 = vmatprep.subr.mxu0 0.0
    %959 = vmatpush1.msra.mxu0 0.0
    %960 = vmatprep.subr.mxu0 0.0
    %961 = vmatpush1.msra.mxu0 0.0
    %962 = vmatprep.subr.mxu0 0.0
    %963 = vmatpush1.msra.mxu0 0.0
    %964 = vmatprep.subr.mxu0 0.0
    %965 = vmatpush1.msra.mxu0 0.0
    %966 = vmatprep.mubr.f32.mxu0 0.0
    %967 = vmatmul.mubr.f32.gmra.mrb[0].mxu0 %v279
    %v968 = vpop.f32.mrb[0].mxu0
    %v969 = vadd.f32 %v900, %v968
    %v970 = vpop.f32.mrb[0].mxu0
    %971 = vdwg.mxu0
    %v972 = vld [vmem:[#allocation6] sm:$0xff]
    %v973 = vld [vmem:[#allocation6 + $0x8] sm:$0xff]
    %v974 = vld [vmem:[#allocation6 + $0x10] sm:$0xff]
    %v975 = vld [vmem:[#allocation6 + $0x18] sm:$0xff]
    %v976 = vld [vmem:[%s13] sm:$0x1]
    %v978 = vlaneseq
    %v979 = vshrl.u32 %v978, 7
    %v980 = vsub.s32 0, %v979
    %v981 = vrot.slane %v976, %v980
    %983 = vmatprep.subr.mxu0 0.0
    %984 = vmatpush1.msra.mxu0 %v972
    %985 = vmatprep.subr.mxu0 0.0
    %986 = vmatpush1.msra.mxu0 %v973
    %987 = vmatprep.subr.mxu0 0.0
    %988 = vmatpush1.msra.mxu0 %v974
    %989 = vmatprep.subr.mxu0 0.0
    %990 = vmatpush1.msra.mxu0 %v975
    %991 = vmatprep.subr.mxu0 0.0
    %992 = vmatpush1.msra.mxu0 0.0
    %993 = vmatprep.subr.mxu0 0.0
    %994 = vmatpush1.msra.mxu0 0.0
    %995 = vmatprep.subr.mxu0 0.0
    %996 = vmatpush1.msra.mxu0 0.0
    %997 = vmatprep.subr.mxu0 0.0
    %998 = vmatpush1.msra.mxu0 0.0
    %999 = vmatprep.subr.mxu0 0.0
    %1000 = vmatpush1.msra.mxu0 0.0
    %1001 = vmatprep.subr.mxu0 0.0
    %1002 = vmatpush1.msra.mxu0 0.0
    %1003 = vmatprep.subr.mxu0 0.0
    %1004 = vmatpush1.msra.mxu0 0.0
    %1005 = vmatprep.subr.mxu0 0.0
    %1006 = vmatpush1.msra.mxu0 0.0
    %1007 = vmatprep.subr.mxu0 0.0
    %1008 = vmatpush1.msra.mxu0 0.0
    %1009 = vmatprep.subr.mxu0 0.0
    %1010 = vmatpush1.msra.mxu0 0.0
    %1011 = vmatprep.subr.mxu0 0.0
    %1012 = vmatpush1.msra.mxu0 0.0
    %1013 = vmatprep.subr.mxu0 0.0
    %1014 = vmatpush1.msra.mxu0 0.0
    %1015 = vmatprep.subr.mxu0 0.0
    %1016 = vmatpush1.msra.mxu0 0.0
    %1017 = vmatprep.subr.mxu0 0.0
    %1018 = vmatpush1.msra.mxu0 0.0
    %1019 = vmatprep.subr.mxu0 0.0
    %1020 = vmatpush1.msra.mxu0 0.0
    %1021 = vmatprep.subr.mxu0 0.0
    %1022 = vmatpush1.msra.mxu0 0.0
    %1023 = vmatprep.subr.mxu0 0.0
    %1024 = vmatpush1.msra.mxu0 0.0
    %1025 = vmatprep.subr.mxu0 0.0
    %1026 = vmatpush1.msra.mxu0 0.0
    %1027 = vmatprep.subr.mxu0 0.0
    %1028 = vmatpush1.msra.mxu0 0.0
    %1029 = vmatprep.subr.mxu0 0.0
    %1030 = vmatpush1.msra.mxu0 0.0
    %1031 = vmatprep.subr.mxu0 0.0
    %1032 = vmatpush1.msra.mxu0 0.0
    %1033 = vmatprep.subr.mxu0 0.0
    %1034 = vmatpush1.msra.mxu0 0.0
    %1035 = vmatprep.subr.mxu0 0.0
    %1036 = vmatpush1.msra.mxu0 0.0
    %1037 = vmatprep.subr.mxu0 0.0
    %1038 = vmatpush1.msra.mxu0 0.0
    %1039 = vmatprep.subr.mxu0 0.0
    %1040 = vmatpush1.msra.mxu0 0.0
    %1041 = vmatprep.subr.mxu0 0.0
    %1042 = vmatpush1.msra.mxu0 0.0
    %1043 = vmatprep.subr.mxu0 0.0
    %1044 = vmatpush1.msra.mxu0 0.0
    %1045 = vmatprep.subr.mxu0 0.0
    %1046 = vmatpush1.msra.mxu0 0.0
    %1047 = vmatprep.mubr.f32.mxu0 0.0
    %1048 = vmatmul.mubr.f32.gmra.mrb[0].mxu0 %v279
    %v1049 = vpop.f32.mrb[0].mxu0
    %v1050 = vadd.f32 %v981, %v1049
    %v1051 = vpop.f32.mrb[0].mxu0
    %1052 = vdwg.mxu0
    %v1054 = vsel %vm741, %v767, 0
    %1056 = vmatprep.subr.mxu0 0.0
    %1057 = vmatpush1.msra.mxu0 %v969
    %1058 = vmatprep.subr.mxu0 0.0
    %1059 = vmatpush1.msra.mxu0 0.0
    %1060 = vmatprep.subr.mxu0 0.0
    %1061 = vmatpush1.msra.mxu0 0.0
    %1062 = vmatprep.subr.mxu0 0.0
    %1063 = vmatpush1.msra.mxu0 0.0
    %1064 = vmatprep.subr.mxu0 0.0
    %1065 = vmatpush1.msra.mxu0 0.0
    %1066 = vmatprep.subr.mxu0 0.0
    %1067 = vmatpush1.msra.mxu0 0.0
    %1068 = vmatprep.subr.mxu0 0.0
    %1069 = vmatpush1.msra.mxu0 0.0
    %1070 = vmatprep.subr.mxu0 0.0
    %1071 = vmatpush1.msra.mxu0 0.0
    %1072 = vmatprep.subr.mxu0 0.0
    %1073 = vmatpush1.msra.mxu0 0.0
    %1074 = vmatprep.subr.mxu0 0.0
    %1075 = vmatpush1.msra.mxu0 0.0
    %1076 = vmatprep.subr.mxu0 0.0
    %1077 = vmatpush1.msra.mxu0 0.0
    %1078 = vmatprep.subr.mxu0 0.0
    %1079 = vmatpush1.msra.mxu0 0.0
    %1080 = vmatprep.subr.mxu0 0.0
    %1081 = vmatpush1.msra.mxu0 0.0
    %1082 = vmatprep.subr.mxu0 0.0
    %1083 = vmatpush1.msra.mxu0 0.0
    %1084 = vmatprep.subr.mxu0 0.0
    %1085 = vmatpush1.msra.mxu0 0.0
    %1086 = vmatprep.subr.mxu0 0.0
    %1087 = vmatpush1.msra.mxu0 0.0
    %1088 = vmatprep.subr.mxu0 0.0
    %1089 = vmatpush1.msra.mxu0 0.0
    %1090 = vmatprep.subr.mxu0 0.0
    %1091 = vmatpush1.msra.mxu0 0.0
    %1092 = vmatprep.subr.mxu0 0.0
    %1093 = vmatpush1.msra.mxu0 0.0
    %1094 = vmatprep.subr.mxu0 0.0
    %1095 = vmatpush1.msra.mxu0 0.0
    %1096 = vmatprep.subr.mxu0 0.0
    %1097 = vmatpush1.msra.mxu0 0.0
    %1098 = vmatprep.subr.mxu0 0.0
    %1099 = vmatpush1.msra.mxu0 0.0
    %1100 = vmatprep.subr.mxu0 0.0
    %1101 = vmatpush1.msra.mxu0 0.0
    %1102 = vmatprep.subr.mxu0 0.0
    %1103 = vmatpush1.msra.mxu0 0.0
    %1104 = vmatprep.subr.mxu0 0.0
    %1105 = vmatpush1.msra.mxu0 0.0
    %1106 = vmatprep.subr.mxu0 0.0
    %1107 = vmatpush1.msra.mxu0 0.0
    %1108 = vmatprep.subr.mxu0 0.0
    %1109 = vmatpush1.msra.mxu0 0.0
    %1110 = vmatprep.subr.mxu0 0.0
    %1111 = vmatpush1.msra.mxu0 0.0
    %1112 = vmatprep.subr.mxu0 0.0
    %1113 = vmatpush1.msra.mxu0 0.0
    %1114 = vmatprep.subr.mxu0 0.0
    %1115 = vmatpush1.msra.mxu0 0.0
    %1116 = vmatprep.subr.mxu0 0.0
    %1117 = vmatpush1.msra.mxu0 0.0
    %1118 = vmatprep.subr.mxu0 0.0
    %1119 = vmatpush1.msra.mxu0 0.0
    %1120 = vmatprep.mubr.f32.mxu0 0.0
    %1121 = vmatmul.mubr.f32.gmra.mrb[0].mxu0 %v1054
    %v1122 = vpop.f32.mrb[0].mxu0
    %v1123 = vadd.f32 0.0, %v1122
    %v1124 = vpop.f32.mrb[0].mxu0
    %1125 = vdwg.mxu0
    %v1127 = vsel %vm741, %v890, 0
    %1129 = vmatprep.subr.mxu0 0.0
    %1130 = vmatpush1.msra.mxu0 %v1050
    %1131 = vmatprep.subr.mxu0 0.0
    %1132 = vmatpush1.msra.mxu0 0.0
    %1133 = vmatprep.subr.mxu0 0.0
    %1134 = vmatpush1.msra.mxu0 0.0
    %1135 = vmatprep.subr.mxu0 0.0
    %1136 = vmatpush1.msra.mxu0 0.0
    %1137 = vmatprep.subr.mxu0 0.0
    %1138 = vmatpush1.msra.mxu0 0.0
    %1139 = vmatprep.subr.mxu0 0.0
    %1140 = vmatpush1.msra.mxu0 0.0
    %1141 = vmatprep.subr.mxu0 0.0
    %1142 = vmatpush1.msra.mxu0 0.0
    %1143 = vmatprep.subr.mxu0 0.0
    %1144 = vmatpush1.msra.mxu0 0.0
    %1145 = vmatprep.subr.mxu0 0.0
    %1146 = vmatpush1.msra.mxu0 0.0
    %1147 = vmatprep.subr.mxu0 0.0
    %1148 = vmatpush1.msra.mxu0 0.0
    %1149 = vmatprep.subr.mxu0 0.0
    %1150 = vmatpush1.msra.mxu0 0.0
    %1151 = vmatprep.subr.mxu0 0.0
    %1152 = vmatpush1.msra.mxu0 0.0
    %1153 = vmatprep.subr.mxu0 0.0
    %1154 = vmatpush1.msra.mxu0 0.0
    %1155 = vmatprep.subr.mxu0 0.0
    %1156 = vmatpush1.msra.mxu0 0.0
    %1157 = vmatprep.subr.mxu0 0.0
    %1158 = vmatpush1.msra.mxu0 0.0
    %1159 = vmatprep.subr.mxu0 0.0
    %1160 = vmatpush1.msra.mxu0 0.0
    %1161 = vmatprep.subr.mxu0 0.0
    %1162 = vmatpush1.msra.mxu0 0.0
    %1163 = vmatprep.subr.mxu0 0.0
    %1164 = vmatpush1.msra.mxu0 0.0
    %1165 = vmatprep.subr.mxu0 0.0
    %1166 = vmatpush1.msra.mxu0 0.0
    %1167 = vmatprep.subr.mxu0 0.0
    %1168 = vmatpush1.msra.mxu0 0.0
    %1169 = vmatprep.subr.mxu0 0.0
    %1170 = vmatpush1.msra.mxu0 0.0
    %1171 = vmatprep.subr.mxu0 0.0
    %1172 = vmatpush1.msra.mxu0 0.0
    %1173 = vmatprep.subr.mxu0 0.0
    %1174 = vmatpush1.msra.mxu0 0.0
    %1175 = vmatprep.subr.mxu0 0.0
    %1176 = vmatpush1.msra.mxu0 0.0
    %1177 = vmatprep.subr.mxu0 0.0
    %1178 = vmatpush1.msra.mxu0 0.0
    %1179 = vmatprep.subr.mxu0 0.0
    %1180 = vmatpush1.msra.mxu0 0.0
    %1181 = vmatprep.subr.mxu0 0.0
    %1182 = vmatpush1.msra.mxu0 0.0
    %1183 = vmatprep.subr.mxu0 0.0
    %1184 = vmatpush1.msra.mxu0 0.0
    %1185 = vmatprep.subr.mxu0 0.0
    %1186 = vmatpush1.msra.mxu0 0.0
    %1187 = vmatprep.subr.mxu0 0.0
    %1188 = vmatpush1.msra.mxu0 0.0
    %1189 = vmatprep.subr.mxu0 0.0
    %1190 = vmatpush1.msra.mxu0 0.0
    %1191 = vmatprep.subr.mxu0 0.0
    %1192 = vmatpush1.msra.mxu0 0.0
    %1193 = vmatprep.mubr.f32.mxu0 0.0
    %1194 = vmatmul.mubr.f32.gmra.mrb[0].mxu0 %v1127
    %v1195 = vpop.f32.mrb[0].mxu0
    %v1196 = vadd.f32 0.0, %v1195
    %v1197 = vpop.f32.mrb[0].mxu0
    %1198 = vdwg.mxu0
    %s1199 = scalar_lea.vmem %s10, 32
    %v1200 = vld [vmem:[%s1199] sm:$0xff]
    %v1201 = vld [vmem:[%s1199 + $0x8] sm:$0xff]
    %v1202 = vld [vmem:[%s1199 + $0x10] sm:$0xff]
    %v1203 = vld [vmem:[%s1199 + $0x18] sm:$0xff]
    %s1204 = scalar_lea.vmem %s11, 1
    %v1205 = vld [vmem:[%s1204] sm:$0x1]
    %v1207 = vlaneseq
    %v1208 = vshrl.u32 %v1207, 7
    %v1209 = vsub.s32 0, %v1208
    %v1210 = vrot.slane %v1205, %v1209
    %v1213 = vsel %vm193, %v1123, 0
    %1215 = vmatprep.subr.mxu0 0.0
    %1216 = vmatpush1.msra.mxu0 %v1200
    %1217 = vmatprep.subr.mxu0 0.0
    %1218 = vmatpush1.msra.mxu0 %v1201
    %1219 = vmatprep.subr.mxu0 0.0
    %1220 = vmatpush1.msra.mxu0 %v1202
    %1221 = vmatprep.subr.mxu0 0.0
    %1222 = vmatpush1.msra.mxu0 %v1203
    %1223 = vmatprep.subr.mxu0 0.0
    %1224 = vmatpush1.msra.mxu0 0.0
    %1225 = vmatprep.subr.mxu0 0.0
    %1226 = vmatpush1.msra.mxu0 0.0
    %1227 = vmatprep.subr.mxu0 0.0
    %1228 = vmatpush1.msra.mxu0 0.0
    %1229 = vmatprep.subr.mxu0 0.0
    %1230 = vmatpush1.msra.mxu0 0.0
    %1231 = vmatprep.subr.mxu0 0.0
    %1232 = vmatpush1.msra.mxu0 0.0
    %1233 = vmatprep.subr.mxu0 0.0
    %1234 = vmatpush1.msra.mxu0 0.0
    %1235 = vmatprep.subr.mxu0 0.0
    %1236 = vmatpush1.msra.mxu0 0.0
    %1237 = vmatprep.subr.mxu0 0.0
    %1238 = vmatpush1.msra.mxu0 0.0
    %1239 = vmatprep.subr.mxu0 0.0
    %1240 = vmatpush1.msra.mxu0 0.0
    %1241 = vmatprep.subr.mxu0 0.0
    %1242 = vmatpush1.msra.mxu0 0.0
    %1243 = vmatprep.subr.mxu0 0.0
    %1244 = vmatpush1.msra.mxu0 0.0
    %1245 = vmatprep.subr.mxu0 0.0
    %1246 = vmatpush1.msra.mxu0 0.0
    %1247 = vmatprep.subr.mxu0 0.0
    %1248 = vmatpush1.msra.mxu0 0.0
    %1249 = vmatprep.subr.mxu0 0.0
    %1250 = vmatpush1.msra.mxu0 0.0
    %1251 = vmatprep.subr.mxu0 0.0
    %1252 = vmatpush1.msra.mxu0 0.0
    %1253 = vmatprep.subr.mxu0 0.0
    %1254 = vmatpush1.msra.mxu0 0.0
    %1255 = vmatprep.subr.mxu0 0.0
    %1256 = vmatpush1.msra.mxu0 0.0
    %1257 = vmatprep.subr.mxu0 0.0
    %1258 = vmatpush1.msra.mxu0 0.0
    %1259 = vmatprep.subr.mxu0 0.0
    %1260 = vmatpush1.msra.mxu0 0.0
    %1261 = vmatprep.subr.mxu0 0.0
    %1262 = vmatpush1.msra.mxu0 0.0
    %1263 = vmatprep.subr.mxu0 0.0
    %1264 = vmatpush1.msra.mxu0 0.0
    %1265 = vmatprep.subr.mxu0 0.0
    %1266 = vmatpush1.msra.mxu0 0.0
    %1267 = vmatprep.subr.mxu0 0.0
    %1268 = vmatpush1.msra.mxu0 0.0
    %1269 = vmatprep.subr.mxu0 0.0
    %1270 = vmatpush1.msra.mxu0 0.0
    %1271 = vmatprep.subr.mxu0 0.0
    %1272 = vmatpush1.msra.mxu0 0.0
    %1273 = vmatprep.subr.mxu0 0.0
    %1274 = vmatpush1.msra.mxu0 0.0
    %1275 = vmatprep.subr.mxu0 0.0
    %1276 = vmatpush1.msra.mxu0 0.0
    %1277 = vmatprep.subr.mxu0 0.0
    %1278 = vmatpush1.msra.mxu0 0.0
    %1279 = vmatprep.mubr.f32.mxu0 0.0
    %1280 = vmatmul.mubr.f32.gmra.mrb[0].mxu0 %v1213
    %v1281 = vpop.f32.mrb[0].mxu0
    %v1282 = vadd.f32 %v1210, %v1281
    %v1283 = vpop.f32.mrb[0].mxu0
    %1284 = vdwg.mxu0
    %s1285 = scalar_lea.vmem [#allocation6], 32
    %v1286 = vld [vmem:[%s1285] sm:$0xff]
    %v1287 = vld [vmem:[%s1285 + $0x8] sm:$0xff]
    %v1288 = vld [vmem:[%s1285 + $0x10] sm:$0xff]
    %v1289 = vld [vmem:[%s1285 + $0x18] sm:$0xff]
    %s1290 = scalar_lea.vmem %s13, 1
    %v1291 = vld [vmem:[%s1290] sm:$0x1]
    %v1293 = vlaneseq
    %v1294 = vshrl.u32 %v1293, 7
    %v1295 = vsub.s32 0, %v1294
    %v1296 = vrot.slane %v1291, %v1295
    %v1299 = vsel %vm193, %v1196, 0
    %1301 = vmatprep.subr.mxu0 0.0
    %1302 = vmatpush1.msra.mxu0 %v1286
    %1303 = vmatprep.subr.mxu0 0.0
    %1304 = vmatpush1.msra.mxu0 %v1287
    %1305 = vmatprep.subr.mxu0 0.0
    %1306 = vmatpush1.msra.mxu0 %v1288
    %1307 = vmatprep.subr.mxu0 0.0
    %1308 = vmatpush1.msra.mxu0 %v1289
    %1309 = vmatprep.subr.mxu0 0.0
    %1310 = vmatpush1.msra.mxu0 0.0
    %1311 = vmatprep.subr.mxu0 0.0
    %1312 = vmatpush1.msra.mxu0 0.0
    %1313 = vmatprep.subr.mxu0 0.0
    %1314 = vmatpush1.msra.mxu0 0.0
    %1315 = vmatprep.subr.mxu0 0.0
    %1316 = vmatpush1.msra.mxu0 0.0
    %1317 = vmatprep.subr.mxu0 0.0
    %1318 = vmatpush1.msra.mxu0 0.0
    %1319 = vmatprep.subr.mxu0 0.0
    %1320 = vmatpush1.msra.mxu0 0.0
    %1321 = vmatprep.subr.mxu0 0.0
    %1322 = vmatpush1.msra.mxu0 0.0
    %1323 = vmatprep.subr.mxu0 0.0
    %1324 = vmatpush1.msra.mxu0 0.0
    %1325 = vmatprep.subr.mxu0 0.0
    %1326 = vmatpush1.msra.mxu0 0.0
    %1327 = vmatprep.subr.mxu0 0.0
    %1328 = vmatpush1.msra.mxu0 0.0
    %1329 = vmatprep.subr.mxu0 0.0
    %1330 = vmatpush1.msra.mxu0 0.0
    %1331 = vmatprep.subr.mxu0 0.0
    %1332 = vmatpush1.msra.mxu0 0.0
    %1333 = vmatprep.subr.mxu0 0.0
    %1334 = vmatpush1.msra.mxu0 0.0
    %1335 = vmatprep.subr.mxu0 0.0
    %1336 = vmatpush1.msra.mxu0 0.0
    %1337 = vmatprep.subr.mxu0 0.0
    %1338 = vmatpush1.msra.mxu0 0.0
    %1339 = vmatprep.subr.mxu0 0.0
    %1340 = vmatpush1.msra.mxu0 0.0
    %1341 = vmatprep.subr.mxu0 0.0
    %1342 = vmatpush1.msra.mxu0 0.0
    %1343 = vmatprep.subr.mxu0 0.0
    %1344 = vmatpush1.msra.mxu0 0.0
    %1345 = vmatprep.subr.mxu0 0.0
    %1346 = vmatpush1.msra.mxu0 0.0
    %1347 = vmatprep.subr.mxu0 0.0
    %1348 = vmatpush1.msra.mxu0 0.0
    %1349 = vmatprep.subr.mxu0 0.0
    %1350 = vmatpush1.msra.mxu0 0.0
    %1351 = vmatprep.subr.mxu0 0.0
    %1352 = vmatpush1.msra.mxu0 0.0
    %1353 = vmatprep.subr.mxu0 0.0
    %1354 = vmatpush1.msra.mxu0 0.0
    %1355 = vmatprep.subr.mxu0 0.0
    %1356 = vmatpush1.msra.mxu0 0.0
    %1357 = vmatprep.subr.mxu0 0.0
    %1358 = vmatpush1.msra.mxu0 0.0
    %1359 = vmatprep.subr.mxu0 0.0
    %1360 = vmatpush1.msra.mxu0 0.0
    %1361 = vmatprep.subr.mxu0 0.0
    %1362 = vmatpush1.msra.mxu0 0.0
    %1363 = vmatprep.subr.mxu0 0.0
    %1364 = vmatpush1.msra.mxu0 0.0
    %1365 = vmatprep.mubr.f32.mxu0 0.0
    %1366 = vmatmul.mubr.f32.gmra.mrb[0].mxu0 %v1299
    %v1367 = vpop.f32.mrb[0].mxu0
    %v1368 = vadd.f32 %v1296, %v1367
    %v1369 = vpop.f32.mrb[0].mxu0
    %1370 = vdwg.mxu0
    %1371 = vmatprep.subr.mxu0 0.0
    %1372 = vmatpush1.msra.mxu0 %v1282
    %1373 = vmatprep.subr.mxu0 0.0
    %1374 = vmatpush1.msra.mxu0 0.0
    %1375 = vmatprep.subr.mxu0 0.0
    %1376 = vmatpush1.msra.mxu0 0.0
    %1377 = vmatprep.subr.mxu0 0.0
    %1378 = vmatpush1.msra.mxu0 0.0
    %1379 = vmatprep.subr.mxu0 0.0
    %1380 = vmatpush1.msra.mxu0 0.0
    %1381 = vmatprep.subr.mxu0 0.0
    %1382 = vmatpush1.msra.mxu0 0.0
    %1383 = vmatprep.subr.mxu0 0.0
    %1384 = vmatpush1.msra.mxu0 0.0
    %1385 = vmatprep.subr.mxu0 0.0
    %1386 = vmatpush1.msra.mxu0 0.0
    %1387 = vmatprep.subr.mxu0 0.0
    %1388 = vmatpush1.msra.mxu0 0.0
    %1389 = vmatprep.subr.mxu0 0.0
    %1390 = vmatpush1.msra.mxu0 0.0
    %1391 = vmatprep.subr.mxu0 0.0
    %1392 = vmatpush1.msra.mxu0 0.0
    %1393 = vmatprep.subr.mxu0 0.0
    %1394 = vmatpush1.msra.mxu0 0.0
    %1395 = vmatprep.subr.mxu0 0.0
    %1396 = vmatpush1.msra.mxu0 0.0
    %1397 = vmatprep.subr.mxu0 0.0
    %1398 = vmatpush1.msra.mxu0 0.0
    %1399 = vmatprep.subr.mxu0 0.0
    %1400 = vmatpush1.msra.mxu0 0.0
    %1401 = vmatprep.subr.mxu0 0.0
    %1402 = vmatpush1.msra.mxu0 0.0
    %1403 = vmatprep.subr.mxu0 0.0
    %1404 = vmatpush1.msra.mxu0 0.0
    %1405 = vmatprep.subr.mxu0 0.0
    %1406 = vmatpush1.msra.mxu0 0.0
    %1407 = vmatprep.subr.mxu0 0.0
    %1408 = vmatpush1.msra.mxu0 0.0
    %1409 = vmatprep.subr.mxu0 0.0
    %1410 = vmatpush1.msra.mxu0 0.0
    %1411 = vmatprep.subr.mxu0 0.0
    %1412 = vmatpush1.msra.mxu0 0.0
    %1413 = vmatprep.subr.mxu0 0.0
    %1414 = vmatpush1.msra.mxu0 0.0
    %1415 = vmatprep.subr.mxu0 0.0
    %1416 = vmatpush1.msra.mxu0 0.0
    %1417 = vmatprep.subr.mxu0 0.0
    %1418 = vmatpush1.msra.mxu0 0.0
    %1419 = vmatprep.subr.mxu0 0.0
    %1420 = vmatpush1.msra.mxu0 0.0
    %1421 = vmatprep.subr.mxu0 0.0
    %1422 = vmatpush1.msra.mxu0 0.0
    %1423 = vmatprep.subr.mxu0 0.0
    %1424 = vmatpush1.msra.mxu0 0.0
    %1425 = vmatprep.subr.mxu0 0.0
    %1426 = vmatpush1.msra.mxu0 0.0
    %1427 = vmatprep.subr.mxu0 0.0
    %1428 = vmatpush1.msra.mxu0 0.0
    %1429 = vmatprep.subr.mxu0 0.0
    %1430 = vmatpush1.msra.mxu0 0.0
    %1431 = vmatprep.subr.mxu0 0.0
    %1432 = vmatpush1.msra.mxu0 0.0
    %1433 = vmatprep.subr.mxu0 0.0
    %1434 = vmatpush1.msra.mxu0 0.0
    %1435 = vmatprep.mubr.f32.mxu0 0.0
    %1436 = vmatmul.mubr.f32.gmra.mrb[0].mxu0 %v1054
    %v1437 = vpop.f32.mrb[0].mxu0
    %v1438 = vadd.f32 0.0, %v1437
    %v1439 = vpop.f32.mrb[0].mxu0
    %1440 = vdwg.mxu0
    %1441 = vmatprep.subr.mxu0 0.0
    %1442 = vmatpush1.msra.mxu0 %v1368
    %1443 = vmatprep.subr.mxu0 0.0
    %1444 = vmatpush1.msra.mxu0 0.0
    %1445 = vmatprep.subr.mxu0 0.0
    %1446 = vmatpush1.msra.mxu0 0.0
    %1447 = vmatprep.subr.mxu0 0.0
    %1448 = vmatpush1.msra.mxu0 0.0
    %1449 = vmatprep.subr.mxu0 0.0
    %1450 = vmatpush1.msra.mxu0 0.0
    %1451 = vmatprep.subr.mxu0 0.0
    %1452 = vmatpush1.msra.mxu0 0.0
    %1453 = vmatprep.subr.mxu0 0.0
    %1454 = vmatpush1.msra.mxu0 0.0
    %1455 = vmatprep.subr.mxu0 0.0
    %1456 = vmatpush1.msra.mxu0 0.0
    %1457 = vmatprep.subr.mxu0 0.0
    %1458 = vmatpush1.msra.mxu0 0.0
    %1459 = vmatprep.subr.mxu0 0.0
    %1460 = vmatpush1.msra.mxu0 0.0
    %1461 = vmatprep.subr.mxu0 0.0
    %1462 = vmatpush1.msra.mxu0 0.0
    %1463 = vmatprep.subr.mxu0 0.0
    %1464 = vmatpush1.msra.mxu0 0.0
    %1465 = vmatprep.subr.mxu0 0.0
    %1466 = vmatpush1.msra.mxu0 0.0
    %1467 = vmatprep.subr.mxu0 0.0
    %1468 = vmatpush1.msra.mxu0 0.0
    %1469 = vmatprep.subr.mxu0 0.0
    %1470 = vmatpush1.msra.mxu0 0.0
    %1471 = vmatprep.subr.mxu0 0.0
    %1472 = vmatpush1.msra.mxu0 0.0
    %1473 = vmatprep.subr.mxu0 0.0
    %1474 = vmatpush1.msra.mxu0 0.0
    %1475 = vmatprep.subr.mxu0 0.0
    %1476 = vmatpush1.msra.mxu0 0.0
    %1477 = vmatprep.subr.mxu0 0.0
    %1478 = vmatpush1.msra.mxu0 0.0
    %1479 = vmatprep.subr.mxu0 0.0
    %1480 = vmatpush1.msra.mxu0 0.0
    %1481 = vmatprep.subr.mxu0 0.0
    %1482 = vmatpush1.msra.mxu0 0.0
    %1483 = vmatprep.subr.mxu0 0.0
    %1484 = vmatpush1.msra.mxu0 0.0
    %1485 = vmatprep.subr.mxu0 0.0
    %1486 = vmatpush1.msra.mxu0 0.0
    %1487 = vmatprep.subr.mxu0 0.0
    %1488 = vmatpush1.msra.mxu0 0.0
    %1489 = vmatprep.subr.mxu0 0.0
    %1490 = vmatpush1.msra.mxu0 0.0
    %1491 = vmatprep.subr.mxu0 0.0
    %1492 = vmatpush1.msra.mxu0 0.0
    %1493 = vmatprep.subr.mxu0 0.0
    %1494 = vmatpush1.msra.mxu0 0.0
    %1495 = vmatprep.subr.mxu0 0.0
    %1496 = vmatpush1.msra.mxu0 0.0
    %1497 = vmatprep.subr.mxu0 0.0
    %1498 = vmatpush1.msra.mxu0 0.0
    %1499 = vmatprep.subr.mxu0 0.0
    %1500 = vmatpush1.msra.mxu0 0.0
    %1501 = vmatprep.subr.mxu0 0.0
    %1502 = vmatpush1.msra.mxu0 0.0
    %1503 = vmatprep.subr.mxu0 0.0
    %1504 = vmatpush1.msra.mxu0 0.0
    %1505 = vmatprep.mubr.f32.mxu0 0.0
    %1506 = vmatmul.mubr.f32.gmra.mrb[0].mxu0 %v1127
    %v1507 = vpop.f32.mrb[0].mxu0
    %v1508 = vadd.f32 0.0, %v1507
    %v1509 = vpop.f32.mrb[0].mxu0
    %1510 = vdwg.mxu0
    %s1511 = scalar_lea.vmem %s10, 64
    %v1512 = vld [vmem:[%s1511] sm:$0xff]
    %v1513 = vld [vmem:[%s1511 + $0x8] sm:$0xff]
    %v1514 = vld [vmem:[%s1511 + $0x10] sm:$0xff]
    %v1515 = vld [vmem:[%s1511 + $0x18] sm:$0xff]
    %s1516 = scalar_lea.vmem %s11, 2
    %v1517 = vld [vmem:[%s1516] sm:$0x1]
    %v1519 = vlaneseq
    %v1520 = vshrl.u32 %v1519, 7
    %v1521 = vsub.s32 0, %v1520
    %v1522 = vrot.slane %v1517, %v1521
    %v1525 = vsel %vm193, %v1438, 0
    %1527 = vmatprep.subr.mxu0 0.0
    %1528 = vmatpush1.msra.mxu0 %v1512
    %1529 = vmatprep.subr.mxu0 0.0
    %1530 = vmatpush1.msra.mxu0 %v1513
    %1531 = vmatprep.subr.mxu0 0.0
    %1532 = vmatpush1.msra.mxu0 %v1514
    %1533 = vmatprep.subr.mxu0 0.0
    %1534 = vmatpush1.msra.mxu0 %v1515
    %1535 = vmatprep.subr.mxu0 0.0
    %1536 = vmatpush1.msra.mxu0 0.0
    %1537 = vmatprep.subr.mxu0 0.0
    %1538 = vmatpush1.msra.mxu0 0.0
    %1539 = vmatprep.subr.mxu0 0.0
    %1540 = vmatpush1.msra.mxu0 0.0
    %1541 = vmatprep.subr.mxu0 0.0
    %1542 = vmatpush1.msra.mxu0 0.0
    %1543 = vmatprep.subr.mxu0 0.0
    %1544 = vmatpush1.msra.mxu0 0.0
    %1545 = vmatprep.subr.mxu0 0.0
    %1546 = vmatpush1.msra.mxu0 0.0
    %1547 = vmatprep.subr.mxu0 0.0
    %1548 = vmatpush1.msra.mxu0 0.0
    %1549 = vmatprep.subr.mxu0 0.0
    %1550 = vmatpush1.msra.mxu0 0.0
    %1551 = vmatprep.subr.mxu0 0.0
    %1552 = vmatpush1.msra.mxu0 0.0
    %1553 = vmatprep.subr.mxu0 0.0
    %1554 = vmatpush1.msra.mxu0 0.0
    %1555 = vmatprep.subr.mxu0 0.0
    %1556 = vmatpush1.msra.mxu0 0.0
    %1557 = vmatprep.subr.mxu0 0.0
    %1558 = vmatpush1.msra.mxu0 0.0
    %1559 = vmatprep.subr.mxu0 0.0
    %1560 = vmatpush1.msra.mxu0 0.0
    %1561 = vmatprep.subr.mxu0 0.0
    %1562 = vmatpush1.msra.mxu0 0.0
    %1563 = vmatprep.subr.mxu0 0.0
    %1564 = vmatpush1.msra.mxu0 0.0
    %1565 = vmatprep.subr.mxu0 0.0
    %1566 = vmatpush1.msra.mxu0 0.0
    %1567 = vmatprep.subr.mxu0 0.0
    %1568 = vmatpush1.msra.mxu0 0.0
    %1569 = vmatprep.subr.mxu0 0.0
    %1570 = vmatpush1.msra.mxu0 0.0
    %1571 = vmatprep.subr.mxu0 0.0
    %1572 = vmatpush1.msra.mxu0 0.0
    %1573 = vmatprep.subr.mxu0 0.0
    %1574 = vmatpush1.msra.mxu0 0.0
    %1575 = vmatprep.subr.mxu0 0.0
    %1576 = vmatpush1.msra.mxu0 0.0
    %1577 = vmatprep.subr.mxu0 0.0
    %1578 = vmatpush1.msra.mxu0 0.0
    %1579 = vmatprep.subr.mxu0 0.0
    %1580 = vmatpush1.msra.mxu0 0.0
    %1581 = vmatprep.subr.mxu0 0.0
    %1582 = vmatpush1.msra.mxu0 0.0
    %1583 = vmatprep.subr.mxu0 0.0
    %1584 = vmatpush1.msra.mxu0 0.0
    %1585 = vmatprep.subr.mxu0 0.0
    %1586 = vmatpush1.msra.mxu0 0.0
    %1587 = vmatprep.subr.mxu0 0.0
    %1588 = vmatpush1.msra.mxu0 0.0
    %1589 = vmatprep.subr.mxu0 0.0
    %1590 = vmatpush1.msra.mxu0 0.0
    %1591 = vmatprep.mubr.f32.mxu0 0.0
    %1592 = vmatmul.mubr.f32.gmra.mrb[0].mxu0 %v1525
    %v1593 = vpop.f32.mrb[0].mxu0
    %v1594 = vadd.f32 %v1522, %v1593
    %v1595 = vpop.f32.mrb[0].mxu0
    %1596 = vdwg.mxu0
    %s1597 = scalar_lea.vmem [#allocation6], 64
    %v1598 = vld [vmem:[%s1597] sm:$0xff]
    %v1599 = vld [vmem:[%s1597 + $0x8] sm:$0xff]
    %v1600 = vld [vmem:[%s1597 + $0x10] sm:$0xff]
    %v1601 = vld [vmem:[%s1597 + $0x18] sm:$0xff]
    %s1602 = scalar_lea.vmem %s13, 2
    %v1603 = vld [vmem:[%s1602] sm:$0x1]
    %v1605 = vlaneseq
    %v1606 = vshrl.u32 %v1605, 7
    %v1607 = vsub.s32 0, %v1606
    %v1608 = vrot.slane %v1603, %v1607
    %v1611 = vsel %vm193, %v1508, 0
    %1613 = vmatprep.subr.mxu0 0.0
    %1614 = vmatpush1.msra.mxu0 %v1598
    %1615 = vmatprep.subr.mxu0 0.0
    %1616 = vmatpush1.msra.mxu0 %v1599
    %1617 = vmatprep.subr.mxu0 0.0
    %1618 = vmatpush1.msra.mxu0 %v1600
    %1619 = vmatprep.subr.mxu0 0.0
    %1620 = vmatpush1.msra.mxu0 %v1601
    %1621 = vmatprep.subr.mxu0 0.0
    %1622 = vmatpush1.msra.mxu0 0.0
    %1623 = vmatprep.subr.mxu0 0.0
    %1624 = vmatpush1.msra.mxu0 0.0
    %1625 = vmatprep.subr.mxu0 0.0
    %1626 = vmatpush1.msra.mxu0 0.0
    %1627 = vmatprep.subr.mxu0 0.0
    %1628 = vmatpush1.msra.mxu0 0.0
    %1629 = vmatprep.subr.mxu0 0.0
    %1630 = vmatpush1.msra.mxu0 0.0
    %1631 = vmatprep.subr.mxu0 0.0
    %1632 = vmatpush1.msra.mxu0 0.0
    %1633 = vmatprep.subr.mxu0 0.0
    %1634 = vmatpush1.msra.mxu0 0.0
    %1635 = vmatprep.subr.mxu0 0.0
    %1636 = vmatpush1.msra.mxu0 0.0
    %1637 = vmatprep.subr.mxu0 0.0
    %1638 = vmatpush1.msra.mxu0 0.0
    %1639 = vmatprep.subr.mxu0 0.0
    %1640 = vmatpush1.msra.mxu0 0.0
    %1641 = vmatprep.subr.mxu0 0.0
    %1642 = vmatpush1.msra.mxu0 0.0
    %1643 = vmatprep.subr.mxu0 0.0
    %1644 = vmatpush1.msra.mxu0 0.0
    %1645 = vmatprep.subr.mxu0 0.0
    %1646 = vmatpush1.msra.mxu0 0.0
    %1647 = vmatprep.subr.mxu0 0.0
    %1648 = vmatpush1.msra.mxu0 0.0
    %1649 = vmatprep.subr.mxu0 0.0
    %1650 = vmatpush1.msra.mxu0 0.0
    %1651 = vmatprep.subr.mxu0 0.0
    %1652 = vmatpush1.msra.mxu0 0.0
    %1653 = vmatprep.subr.mxu0 0.0
    %1654 = vmatpush1.msra.mxu0 0.0
    %1655 = vmatprep.subr.mxu0 0.0
    %1656 = vmatpush1.msra.mxu0 0.0
    %1657 = vmatprep.subr.mxu0 0.0
    %1658 = vmatpush1.msra.mxu0 0.0
    %1659 = vmatprep.subr.mxu0 0.0
    %1660 = vmatpush1.msra.mxu0 0.0
    %1661 = vmatprep.subr.mxu0 0.0
    %1662 = vmatpush1.msra.mxu0 0.0
    %1663 = vmatprep.subr.mxu0 0.0
    %1664 = vmatpush1.msra.mxu0 0.0
    %1665 = vmatprep.subr.mxu0 0.0
    %1666 = vmatpush1.msra.mxu0 0.0
    %1667 = vmatprep.subr.mxu0 0.0
    %1668 = vmatpush1.msra.mxu0 0.0
    %1669 = vmatprep.subr.mxu0 0.0
    %1670 = vmatpush1.msra.mxu0 0.0
    %1671 = vmatprep.subr.mxu0 0.0
    %1672 = vmatpush1.msra.mxu0 0.0
    %1673 = vmatprep.subr.mxu0 0.0
    %1674 = vmatpush1.msra.mxu0 0.0
    %1675 = vmatprep.subr.mxu0 0.0
    %1676 = vmatpush1.msra.mxu0 0.0
    %1677 = vmatprep.mubr.f32.mxu0 0.0
    %1678 = vmatmul.mubr.f32.gmra.mrb[0].mxu0 %v1611
    %v1679 = vpop.f32.mrb[0].mxu0
    %v1680 = vadd.f32 %v1608, %v1679
    %v1681 = vpop.f32.mrb[0].mxu0
    %1682 = vdwg.mxu0
    %1683 = vmatprep.subr.mxu0 0.0
    %1684 = vmatpush1.msra.mxu0 %v1594
    %1685 = vmatprep.subr.mxu0 0.0
    %1686 = vmatpush1.msra.mxu0 0.0
    %1687 = vmatprep.subr.mxu0 0.0
    %1688 = vmatpush1.msra.mxu0 0.0
    %1689 = vmatprep.subr.mxu0 0.0
    %1690 = vmatpush1.msra.mxu0 0.0
    %1691 = vmatprep.subr.mxu0 0.0
    %1692 = vmatpush1.msra.mxu0 0.0
    %1693 = vmatprep.subr.mxu0 0.0
    %1694 = vmatpush1.msra.mxu0 0.0
    %1695 = vmatprep.subr.mxu0 0.0
    %1696 = vmatpush1.msra.mxu0 0.0
    %1697 = vmatprep.subr.mxu0 0.0
    %1698 = vmatpush1.msra.mxu0 0.0
    %1699 = vmatprep.subr.mxu0 0.0
    %1700 = vmatpush1.msra.mxu0 0.0
    %1701 = vmatprep.subr.mxu0 0.0
    %1702 = vmatpush1.msra.mxu0 0.0
    %1703 = vmatprep.subr.mxu0 0.0
    %1704 = vmatpush1.msra.mxu0 0.0
    %1705 = vmatprep.subr.mxu0 0.0
    %1706 = vmatpush1.msra.mxu0 0.0
    %1707 = vmatprep.subr.mxu0 0.0
    %1708 = vmatpush1.msra.mxu0 0.0
    %1709 = vmatprep.subr.mxu0 0.0
    %1710 = vmatpush1.msra.mxu0 0.0
    %1711 = vmatprep.subr.mxu0 0.0
    %1712 = vmatpush1.msra.mxu0 0.0
    %1713 = vmatprep.subr.mxu0 0.0
    %1714 = vmatpush1.msra.mxu0 0.0
    %1715 = vmatprep.subr.mxu0 0.0
    %1716 = vmatpush1.msra.mxu0 0.0
    %1717 = vmatprep.subr.mxu0 0.0
    %1718 = vmatpush1.msra.mxu0 0.0
    %1719 = vmatprep.subr.mxu0 0.0
    %1720 = vmatpush1.msra.mxu0 0.0
    %1721 = vmatprep.subr.mxu0 0.0
    %1722 = vmatpush1.msra.mxu0 0.0
    %1723 = vmatprep.subr.mxu0 0.0
    %1724 = vmatpush1.msra.mxu0 0.0
    %1725 = vmatprep.subr.mxu0 0.0
    %1726 = vmatpush1.msra.mxu0 0.0
    %1727 = vmatprep.subr.mxu0 0.0
    %1728 = vmatpush1.msra.mxu0 0.0
    %1729 = vmatprep.subr.mxu0 0.0
    %1730 = vmatpush1.msra.mxu0 0.0
    %1731 = vmatprep.subr.mxu0 0.0
    %1732 = vmatpush1.msra.mxu0 0.0
    %1733 = vmatprep.subr.mxu0 0.0
    %1734 = vmatpush1.msra.mxu0 0.0
    %1735 = vmatprep.subr.mxu0 0.0
    %1736 = vmatpush1.msra.mxu0 0.0
    %1737 = vmatprep.subr.mxu0 0.0
    %1738 = vmatpush1.msra.mxu0 0.0
    %1739 = vmatprep.subr.mxu0 0.0
    %1740 = vmatpush1.msra.mxu0 0.0
    %1741 = vmatprep.subr.mxu0 0.0
    %1742 = vmatpush1.msra.mxu0 0.0
    %1743 = vmatprep.subr.mxu0 0.0
    %1744 = vmatpush1.msra.mxu0 0.0
    %1745 = vmatprep.subr.mxu0 0.0
    %1746 = vmatpush1.msra.mxu0 0.0
    %1747 = vmatprep.mubr.f32.mxu0 0.0
    %1748 = vmatmul.mubr.f32.gmra.mrb[0].mxu0 %v1054
    %v1749 = vpop.f32.mrb[0].mxu0
    %v1750 = vadd.f32 0.0, %v1749
    %v1751 = vpop.f32.mrb[0].mxu0
    %1752 = vdwg.mxu0
    %1753 = vmatprep.subr.mxu0 0.0
    %1754 = vmatpush1.msra.mxu0 %v1680
    %1755 = vmatprep.subr.mxu0 0.0
    %1756 = vmatpush1.msra.mxu0 0.0
    %1757 = vmatprep.subr.mxu0 0.0
    %1758 = vmatpush1.msra.mxu0 0.0
    %1759 = vmatprep.subr.mxu0 0.0
    %1760 = vmatpush1.msra.mxu0 0.0
    %1761 = vmatprep.subr.mxu0 0.0
    %1762 = vmatpush1.msra.mxu0 0.0
    %1763 = vmatprep.subr.mxu0 0.0
    %1764 = vmatpush1.msra.mxu0 0.0
    %1765 = vmatprep.subr.mxu0 0.0
    %1766 = vmatpush1.msra.mxu0 0.0
    %1767 = vmatprep.subr.mxu0 0.0
    %1768 = vmatpush1.msra.mxu0 0.0
    %1769 = vmatprep.subr.mxu0 0.0
    %1770 = vmatpush1.msra.mxu0 0.0
    %1771 = vmatprep.subr.mxu0 0.0
    %1772 = vmatpush1.msra.mxu0 0.0
    %1773 = vmatprep.subr.mxu0 0.0
    %1774 = vmatpush1.msra.mxu0 0.0
    %1775 = vmatprep.subr.mxu0 0.0
    %1776 = vmatpush1.msra.mxu0 0.0
    %1777 = vmatprep.subr.mxu0 0.0
    %1778 = vmatpush1.msra.mxu0 0.0
    %1779 = vmatprep.subr.mxu0 0.0
    %1780 = vmatpush1.msra.mxu0 0.0
    %1781 = vmatprep.subr.mxu0 0.0
    %1782 = vmatpush1.msra.mxu0 0.0
    %1783 = vmatprep.subr.mxu0 0.0
    %1784 = vmatpush1.msra.mxu0 0.0
    %1785 = vmatprep.subr.mxu0 0.0
    %1786 = vmatpush1.msra.mxu0 0.0
    %1787 = vmatprep.subr.mxu0 0.0
    %1788 = vmatpush1.msra.mxu0 0.0
    %1789 = vmatprep.subr.mxu0 0.0
    %1790 = vmatpush1.msra.mxu0 0.0
    %1791 = vmatprep.subr.mxu0 0.0
    %1792 = vmatpush1.msra.mxu0 0.0
    %1793 = vmatprep.subr.mxu0 0.0
    %1794 = vmatpush1.msra.mxu0 0.0
    %1795 = vmatprep.subr.mxu0 0.0
    %1796 = vmatpush1.msra.mxu0 0.0
    %1797 = vmatprep.subr.mxu0 0.0
    %1798 = vmatpush1.msra.mxu0 0.0
    %1799 = vmatprep.subr.mxu0 0.0
    %1800 = vmatpush1.msra.mxu0 0.0
    %1801 = vmatprep.subr.mxu0 0.0
    %1802 = vmatpush1.msra.mxu0 0.0
    %1803 = vmatprep.subr.mxu0 0.0
    %1804 = vmatpush1.msra.mxu0 0.0
    %1805 = vmatprep.subr.mxu0 0.0
    %1806 = vmatpush1.msra.mxu0 0.0
    %1807 = vmatprep.subr.mxu0 0.0
    %1808 = vmatpush1.msra.mxu0 0.0
    %1809 = vmatprep.subr.mxu0 0.0
    %1810 = vmatpush1.msra.mxu0 0.0
    %1811 = vmatprep.subr.mxu0 0.0
    %1812 = vmatpush1.msra.mxu0 0.0
    %1813 = vmatprep.subr.mxu0 0.0
    %1814 = vmatpush1.msra.mxu0 0.0
    %1815 = vmatprep.subr.mxu0 0.0
    %1816 = vmatpush1.msra.mxu0 0.0
    %1817 = vmatprep.mubr.f32.mxu0 0.0
    %1818 = vmatmul.mubr.f32.gmra.mrb[0].mxu0 %v1127
    %v1819 = vpop.f32.mrb[0].mxu0
    %v1820 = vadd.f32 0.0, %v1819
    %v1821 = vpop.f32.mrb[0].mxu0
    %1822 = vdwg.mxu0
    %s1823 = scalar_lea.vmem %s10, 96
    %v1824 = vld [vmem:[%s1823] sm:$0xff]
    %v1825 = vld [vmem:[%s1823 + $0x8] sm:$0xff]
    %v1826 = vld [vmem:[%s1823 + $0x10] sm:$0xff]
    %v1827 = vld [vmem:[%s1823 + $0x18] sm:$0xff]
    %s1828 = scalar_lea.vmem %s11, 3
    %v1829 = vld [vmem:[%s1828] sm:$0x1]
    %v1831 = vlaneseq
    %v1832 = vshrl.u32 %v1831, 7
    %v1833 = vsub.s32 0, %v1832
    %v1834 = vrot.slane %v1829, %v1833
    %v1837 = vsel %vm193, %v1750, 0
    %1839 = vmatprep.subr.mxu0 0.0
    %1840 = vmatpush1.msra.mxu0 %v1824
    %1841 = vmatprep.subr.mxu0 0.0
    %1842 = vmatpush1.msra.mxu0 %v1825
    %1843 = vmatprep.subr.mxu0 0.0
    %1844 = vmatpush1.msra.mxu0 %v1826
    %1845 = vmatprep.subr.mxu0 0.0
    %1846 = vmatpush1.msra.mxu0 %v1827
    %1847 = vmatprep.subr.mxu0 0.0
    %1848 = vmatpush1.msra.mxu0 0.0
    %1849 = vmatprep.subr.mxu0 0.0
    %1850 = vmatpush1.msra.mxu0 0.0
    %1851 = vmatprep.subr.mxu0 0.0
    %1852 = vmatpush1.msra.mxu0 0.0
    %1853 = vmatprep.subr.mxu0 0.0
    %1854 = vmatpush1.msra.mxu0 0.0
    %1855 = vmatprep.subr.mxu0 0.0
    %1856 = vmatpush1.msra.mxu0 0.0
    %1857 = vmatprep.subr.mxu0 0.0
    %1858 = vmatpush1.msra.mxu0 0.0
    %1859 = vmatprep.subr.mxu0 0.0
    %1860 = vmatpush1.msra.mxu0 0.0
    %1861 = vmatprep.subr.mxu0 0.0
    %1862 = vmatpush1.msra.mxu0 0.0
    %1863 = vmatprep.subr.mxu0 0.0
    %1864 = vmatpush1.msra.mxu0 0.0
    %1865 = vmatprep.subr.mxu0 0.0
    %1866 = vmatpush1.msra.mxu0 0.0
    %1867 = vmatprep.subr.mxu0 0.0
    %1868 = vmatpush1.msra.mxu0 0.0
    %1869 = vmatprep.subr.mxu0 0.0
    %1870 = vmatpush1.msra.mxu0 0.0
    %1871 = vmatprep.subr.mxu0 0.0
    %1872 = vmatpush1.msra.mxu0 0.0
    %1873 = vmatprep.subr.mxu0 0.0
    %1874 = vmatpush1.msra.mxu0 0.0
    %1875 = vmatprep.subr.mxu0 0.0
    %1876 = vmatpush1.msra.mxu0 0.0
    %1877 = vmatprep.subr.mxu0 0.0
    %1878 = vmatpush1.msra.mxu0 0.0
    %1879 = vmatprep.subr.mxu0 0.0
    %1880 = vmatpush1.msra.mxu0 0.0
    %1881 = vmatprep.subr.mxu0 0.0
    %1882 = vmatpush1.msra.mxu0 0.0
    %1883 = vmatprep.subr.mxu0 0.0
    %1884 = vmatpush1.msra.mxu0 0.0
    %1885 = vmatprep.subr.mxu0 0.0
    %1886 = vmatpush1.msra.mxu0 0.0
    %1887 = vmatprep.subr.mxu0 0.0
    %1888 = vmatpush1.msra.mxu0 0.0
    %1889 = vmatprep.subr.mxu0 0.0
    %1890 = vmatpush1.msra.mxu0 0.0
    %1891 = vmatprep.subr.mxu0 0.0
    %1892 = vmatpush1.msra.mxu0 0.0
    %1893 = vmatprep.subr.mxu0 0.0
    %1894 = vmatpush1.msra.mxu0 0.0
    %1895 = vmatprep.subr.mxu0 0.0
    %1896 = vmatpush1.msra.mxu0 0.0
    %1897 = vmatprep.subr.mxu0 0.0
    %1898 = vmatpush1.msra.mxu0 0.0
    %1899 = vmatprep.subr.mxu0 0.0
    %1900 = vmatpush1.msra.mxu0 0.0
    %1901 = vmatprep.subr.mxu0 0.0
    %1902 = vmatpush1.msra.mxu0 0.0
    %1903 = vmatprep.mubr.f32.mxu0 0.0
    %1904 = vmatmul.mubr.f32.gmra.mrb[0].mxu0 %v1837
    %v1905 = vpop.f32.mrb[0].mxu0
    %v1906 = vadd.f32 %v1834, %v1905
    %v1907 = vpop.f32.mrb[0].mxu0
    %1908 = vdwg.mxu0
    %s1909 = scalar_lea.vmem [#allocation6], 96
    %v1910 = vld [vmem:[%s1909] sm:$0xff]
    %v1911 = vld [vmem:[%s1909 + $0x8] sm:$0xff]
    %v1912 = vld [vmem:[%s1909 + $0x10] sm:$0xff]
    %v1913 = vld [vmem:[%s1909 + $0x18] sm:$0xff]
    %s1914 = scalar_lea.vmem %s13, 3
    %v1915 = vld [vmem:[%s1914] sm:$0x1]
    %v1917 = vlaneseq
    %v1918 = vshrl.u32 %v1917, 7
    %v1919 = vsub.s32 0, %v1918
    %v1920 = vrot.slane %v1915, %v1919
    %v1923 = vsel %vm193, %v1820, 0
    %1925 = vmatprep.subr.mxu0 0.0
    %1926 = vmatpush1.msra.mxu0 %v1910
    %1927 = vmatprep.subr.mxu0 0.0
    %1928 = vmatpush1.msra.mxu0 %v1911
    %1929 = vmatprep.subr.mxu0 0.0
    %1930 = vmatpush1.msra.mxu0 %v1912
    %1931 = vmatprep.subr.mxu0 0.0
    %1932 = vmatpush1.msra.mxu0 %v1913
    %1933 = vmatprep.subr.mxu0 0.0
    %1934 = vmatpush1.msra.mxu0 0.0
    %1935 = vmatprep.subr.mxu0 0.0
    %1936 = vmatpush1.msra.mxu0 0.0
    %1937 = vmatprep.subr.mxu0 0.0
    %1938 = vmatpush1.msra.mxu0 0.0
    %1939 = vmatprep.subr.mxu0 0.0
    %1940 = vmatpush1.msra.mxu0 0.0
    %1941 = vmatprep.subr.mxu0 0.0
    %1942 = vmatpush1.msra.mxu0 0.0
    %1943 = vmatprep.subr.mxu0 0.0
    %1944 = vmatpush1.msra.mxu0 0.0
    %1945 = vmatprep.subr.mxu0 0.0
    %1946 = vmatpush1.msra.mxu0 0.0
    %1947 = vmatprep.subr.mxu0 0.0
    %1948 = vmatpush1.msra.mxu0 0.0
    %1949 = vmatprep.subr.mxu0 0.0
    %1950 = vmatpush1.msra.mxu0 0.0
    %1951 = vmatprep.subr.mxu0 0.0
    %1952 = vmatpush1.msra.mxu0 0.0
    %1953 = vmatprep.subr.mxu0 0.0
    %1954 = vmatpush1.msra.mxu0 0.0
    %1955 = vmatprep.subr.mxu0 0.0
    %1956 = vmatpush1.msra.mxu0 0.0
    %1957 = vmatprep.subr.mxu0 0.0
    %1958 = vmatpush1.msra.mxu0 0.0
    %1959 = vmatprep.subr.mxu0 0.0
    %1960 = vmatpush1.msra.mxu0 0.0
    %1961 = vmatprep.subr.mxu0 0.0
    %1962 = vmatpush1.msra.mxu0 0.0
    %1963 = vmatprep.subr.mxu0 0.0
    %1964 = vmatpush1.msra.mxu0 0.0
    %1965 = vmatprep.subr.mxu0 0.0
    %1966 = vmatpush1.msra.mxu0 0.0
    %1967 = vmatprep.subr.mxu0 0.0
    %1968 = vmatpush1.msra.mxu0 0.0
    %1969 = vmatprep.subr.mxu0 0.0
    %1970 = vmatpush1.msra.mxu0 0.0
    %1971 = vmatprep.subr.mxu0 0.0
    %1972 = vmatpush1.msra.mxu0 0.0
    %1973 = vmatprep.subr.mxu0 0.0
    %1974 = vmatpush1.msra.mxu0 0.0
    %1975 = vmatprep.subr.mxu0 0.0
    %1976 = vmatpush1.msra.mxu0 0.0
    %1977 = vmatprep.subr.mxu0 0.0
    %1978 = vmatpush1.msra.mxu0 0.0
    %1979 = vmatprep.subr.mxu0 0.0
    %1980 = vmatpush1.msra.mxu0 0.0
    %1981 = vmatprep.subr.mxu0 0.0
    %1982 = vmatpush1.msra.mxu0 0.0
    %1983 = vmatprep.subr.mxu0 0.0
    %1984 = vmatpush1.msra.mxu0 0.0
    %1985 = vmatprep.subr.mxu0 0.0
    %1986 = vmatpush1.msra.mxu0 0.0
    %1987 = vmatprep.subr.mxu0 0.0
    %1988 = vmatpush1.msra.mxu0 0.0
    %1989 = vmatprep.mubr.f32.mxu0 0.0
    %1990 = vmatmul.mubr.f32.gmra.mrb[0].mxu0 %v1923
    %v1991 = vpop.f32.mrb[0].mxu0
    %v1992 = vadd.f32 %v1920, %v1991
    %v1993 = vpop.f32.mrb[0].mxu0
    %1994 = vdwg.mxu0
    %1995 = vmatprep.subr.mxu0 0.0
    %1996 = vmatpush1.msra.mxu0 %v1906
    %1997 = vmatprep.subr.mxu0 0.0
    %1998 = vmatpush1.msra.mxu0 0.0
    %1999 = vmatprep.subr.mxu0 0.0
    %2000 = vmatpush1.msra.mxu0 0.0
    %2001 = vmatprep.subr.mxu0 0.0
    %2002 = vmatpush1.msra.mxu0 0.0
    %2003 = vmatprep.subr.mxu0 0.0
    %2004 = vmatpush1.msra.mxu0 0.0
    %2005 = vmatprep.subr.mxu0 0.0
    %2006 = vmatpush1.msra.mxu0 0.0
    %2007 = vmatprep.subr.mxu0 0.0
    %2008 = vmatpush1.msra.mxu0 0.0
    %2009 = vmatprep.subr.mxu0 0.0
    %2010 = vmatpush1.msra.mxu0 0.0
    %2011 = vmatprep.subr.mxu0 0.0
    %2012 = vmatpush1.msra.mxu0 0.0
    %2013 = vmatprep.subr.mxu0 0.0
    %2014 = vmatpush1.msra.mxu0 0.0
    %2015 = vmatprep.subr.mxu0 0.0
    %2016 = vmatpush1.msra.mxu0 0.0
    %2017 = vmatprep.subr.mxu0 0.0
    %2018 = vmatpush1.msra.mxu0 0.0
    %2019 = vmatprep.subr.mxu0 0.0
    %2020 = vmatpush1.msra.mxu0 0.0
    %2021 = vmatprep.subr.mxu0 0.0
    %2022 = vmatpush1.msra.mxu0 0.0
    %2023 = vmatprep.subr.mxu0 0.0
    %2024 = vmatpush1.msra.mxu0 0.0
    %2025 = vmatprep.subr.mxu0 0.0
    %2026 = vmatpush1.msra.mxu0 0.0
    %2027 = vmatprep.subr.mxu0 0.0
    %2028 = vmatpush1.msra.mxu0 0.0
    %2029 = vmatprep.subr.mxu0 0.0
    %2030 = vmatpush1.msra.mxu0 0.0
    %2031 = vmatprep.subr.mxu0 0.0
    %2032 = vmatpush1.msra.mxu0 0.0
    %2033 = vmatprep.subr.mxu0 0.0
    %2034 = vmatpush1.msra.mxu0 0.0
    %2035 = vmatprep.subr.mxu0 0.0
    %2036 = vmatpush1.msra.mxu0 0.0
    %2037 = vmatprep.subr.mxu0 0.0
    %2038 = vmatpush1.msra.mxu0 0.0
    %2039 = vmatprep.subr.mxu0 0.0
    %2040 = vmatpush1.msra.mxu0 0.0
    %2041 = vmatprep.subr.mxu0 0.0
    %2042 = vmatpush1.msra.mxu0 0.0
    %2043 = vmatprep.subr.mxu0 0.0
    %2044 = vmatpush1.msra.mxu0 0.0
    %2045 = vmatprep.subr.mxu0 0.0
    %2046 = vmatpush1.msra.mxu0 0.0
    %2047 = vmatprep.subr.mxu0 0.0
    %2048 = vmatpush1.msra.mxu0 0.0
    %2049 = vmatprep.subr.mxu0 0.0
    %2050 = vmatpush1.msra.mxu0 0.0
    %2051 = vmatprep.subr.mxu0 0.0
    %2052 = vmatpush1.msra.mxu0 0.0
    %2053 = vmatprep.subr.mxu0 0.0
    %2054 = vmatpush1.msra.mxu0 0.0
    %2055 = vmatprep.subr.mxu0 0.0
    %2056 = vmatpush1.msra.mxu0 0.0
    %2057 = vmatprep.subr.mxu0 0.0
    %2058 = vmatpush1.msra.mxu0 0.0
    %2059 = vmatprep.mubr.f32.mxu0 0.0
    %2060 = vmatmul.mubr.f32.gmra.mrb[0].mxu0 %v1054
    %v2061 = vpop.f32.mrb[0].mxu0
    %v2062 = vadd.f32 0.0, %v2061
    %v2063 = vpop.f32.mrb[0].mxu0
    %2064 = vdwg.mxu0
    %2065 = vmatprep.subr.mxu0 0.0
    %2066 = vmatpush1.msra.mxu0 %v1992
    %2067 = vmatprep.subr.mxu0 0.0
    %2068 = vmatpush1.msra.mxu0 0.0
    %2069 = vmatprep.subr.mxu0 0.0
    %2070 = vmatpush1.msra.mxu0 0.0
    %2071 = vmatprep.subr.mxu0 0.0
    %2072 = vmatpush1.msra.mxu0 0.0
    %2073 = vmatprep.subr.mxu0 0.0
    %2074 = vmatpush1.msra.mxu0 0.0
    %2075 = vmatprep.subr.mxu0 0.0
    %2076 = vmatpush1.msra.mxu0 0.0
    %2077 = vmatprep.subr.mxu0 0.0
    %2078 = vmatpush1.msra.mxu0 0.0
    %2079 = vmatprep.subr.mxu0 0.0
    %2080 = vmatpush1.msra.mxu0 0.0
    %2081 = vmatprep.subr.mxu0 0.0
    %2082 = vmatpush1.msra.mxu0 0.0
    %2083 = vmatprep.subr.mxu0 0.0
    %2084 = vmatpush1.msra.mxu0 0.0
    %2085 = vmatprep.subr.mxu0 0.0
    %2086 = vmatpush1.msra.mxu0 0.0
    %2087 = vmatprep.subr.mxu0 0.0
    %2088 = vmatpush1.msra.mxu0 0.0
    %2089 = vmatprep.subr.mxu0 0.0
    %2090 = vmatpush1.msra.mxu0 0.0
    %2091 = vmatprep.subr.mxu0 0.0
    %2092 = vmatpush1.msra.mxu0 0.0
    %2093 = vmatprep.subr.mxu0 0.0
    %2094 = vmatpush1.msra.mxu0 0.0
    %2095 = vmatprep.subr.mxu0 0.0
    %2096 = vmatpush1.msra.mxu0 0.0
    %2097 = vmatprep.subr.mxu0 0.0
    %2098 = vmatpush1.msra.mxu0 0.0
    %2099 = vmatprep.subr.mxu0 0.0
    %2100 = vmatpush1.msra.mxu0 0.0
    %2101 = vmatprep.subr.mxu0 0.0
    %2102 = vmatpush1.msra.mxu0 0.0
    %2103 = vmatprep.subr.mxu0 0.0
    %2104 = vmatpush1.msra.mxu0 0.0
    %2105 = vmatprep.subr.mxu0 0.0
    %2106 = vmatpush1.msra.mxu0 0.0
    %2107 = vmatprep.subr.mxu0 0.0
    %2108 = vmatpush1.msra.mxu0 0.0
    %2109 = vmatprep.subr.mxu0 0.0
    %2110 = vmatpush1.msra.mxu0 0.0
    %2111 = vmatprep.subr.mxu0 0.0
    %2112 = vmatpush1.msra.mxu0 0.0
    %2113 = vmatprep.subr.mxu0 0.0
    %2114 = vmatpush1.msra.mxu0 0.0
    %2115 = vmatprep.subr.mxu0 0.0
    %2116 = vmatpush1.msra.mxu0 0.0
    %2117 = vmatprep.subr.mxu0 0.0
    %2118 = vmatpush1.msra.mxu0 0.0
    %2119 = vmatprep.subr.mxu0 0.0
    %2120 = vmatpush1.msra.mxu0 0.0
    %2121 = vmatprep.subr.mxu0 0.0
    %2122 = vmatpush1.msra.mxu0 0.0
    %2123 = vmatprep.subr.mxu0 0.0
    %2124 = vmatpush1.msra.mxu0 0.0
    %2125 = vmatprep.subr.mxu0 0.0
    %2126 = vmatpush1.msra.mxu0 0.0
    %2127 = vmatprep.subr.mxu0 0.0
    %2128 = vmatpush1.msra.mxu0 0.0
    %2129 = vmatprep.mubr.f32.mxu0 0.0
    %2130 = vmatmul.mubr.f32.gmra.mrb[0].mxu0 %v1127
    %v2131 = vpop.f32.mrb[0].mxu0
    %v2132 = vadd.f32 0.0, %v2131
    %v2133 = vpop.f32.mrb[0].mxu0
    %2134 = vdwg.mxu0
    %v2135 = vld [vmem:[%s14] sm:$0xff]
    %v2136 = vld [vmem:[%s14 + $0x8] sm:$0xff]
    %v2137 = vld [vmem:[%s14 + $0x10] sm:$0xff]
    %v2138 = vld [vmem:[%s14 + $0x18] sm:$0xff]
    %v2139 = vld [vmem:[#allocation4] sm:$0x1]
    %v2141 = vlaneseq
    %v2142 = vshrl.u32 %v2141, 7
    %v2143 = vsub.s32 0, %v2142
    %v2144 = vrot.slane %v2139, %v2143
    %v2147 = vsel %vm193, %v2062, 0
    %2149 = vmatprep.subr.mxu0 0.0
    %2150 = vmatpush1.msra.mxu0 %v2135
    %2151 = vmatprep.subr.mxu0 0.0
    %2152 = vmatpush1.msra.mxu0 %v2136
    %2153 = vmatprep.subr.mxu0 0.0
    %2154 = vmatpush1.msra.mxu0 %v2137
    %2155 = vmatprep.subr.mxu0 0.0
    %2156 = vmatpush1.msra.mxu0 %v2138
    %2157 = vmatprep.subr.mxu0 0.0
    %2158 = vmatpush1.msra.mxu0 0.0
    %2159 = vmatprep.subr.mxu0 0.0
    %2160 = vmatpush1.msra.mxu0 0.0
    %2161 = vmatprep.subr.mxu0 0.0
    %2162 = vmatpush1.msra.mxu0 0.0
    %2163 = vmatprep.subr.mxu0 0.0
    %2164 = vmatpush1.msra.mxu0 0.0
    %2165 = vmatprep.subr.mxu0 0.0
    %2166 = vmatpush1.msra.mxu0 0.0
    %2167 = vmatprep.subr.mxu0 0.0
    %2168 = vmatpush1.msra.mxu0 0.0
    %2169 = vmatprep.subr.mxu0 0.0
    %2170 = vmatpush1.msra.mxu0 0.0
    %2171 = vmatprep.subr.mxu0 0.0
    %2172 = vmatpush1.msra.mxu0 0.0
    %2173 = vmatprep.subr.mxu0 0.0
    %2174 = vmatpush1.msra.mxu0 0.0
    %2175 = vmatprep.subr.mxu0 0.0
    %2176 = vmatpush1.msra.mxu0 0.0
    %2177 = vmatprep.subr.mxu0 0.0
    %2178 = vmatpush1.msra.mxu0 0.0
    %2179 = vmatprep.subr.mxu0 0.0
    %2180 = vmatpush1.msra.mxu0 0.0
    %2181 = vmatprep.subr.mxu0 0.0
    %2182 = vmatpush1.msra.mxu0 0.0
    %2183 = vmatprep.subr.mxu0 0.0
    %2184 = vmatpush1.msra.mxu0 0.0
    %2185 = vmatprep.subr.mxu0 0.0
    %2186 = vmatpush1.msra.mxu0 0.0
    %2187 = vmatprep.subr.mxu0 0.0
    %2188 = vmatpush1.msra.mxu0 0.0
    %2189 = vmatprep.subr.mxu0 0.0
    %2190 = vmatpush1.msra.mxu0 0.0
    %2191 = vmatprep.subr.mxu0 0.0
    %2192 = vmatpush1.msra.mxu0 0.0
    %2193 = vmatprep.subr.mxu0 0.0
    %2194 = vmatpush1.msra.mxu0 0.0
    %2195 = vmatprep.subr.mxu0 0.0
    %2196 = vmatpush1.msra.mxu0 0.0
    %2197 = vmatprep.subr.mxu0 0.0
    %2198 = vmatpush1.msra.mxu0 0.0
    %2199 = vmatprep.subr.mxu0 0.0
    %2200 = vmatpush1.msra.mxu0 0.0
    %2201 = vmatprep.subr.mxu0 0.0
    %2202 = vmatpush1.msra.mxu0 0.0
    %2203 = vmatprep.subr.mxu0 0.0
    %2204 = vmatpush1.msra.mxu0 0.0
    %2205 = vmatprep.subr.mxu0 0.0
    %2206 = vmatpush1.msra.mxu0 0.0
    %2207 = vmatprep.subr.mxu0 0.0
    %2208 = vmatpush1.msra.mxu0 0.0
    %2209 = vmatprep.subr.mxu0 0.0
    %2210 = vmatpush1.msra.mxu0 0.0
    %2211 = vmatprep.subr.mxu0 0.0
    %2212 = vmatpush1.msra.mxu0 0.0
    %2213 = vmatprep.mubr.f32.mxu0 0.0
    %2214 = vmatmul.mubr.f32.gmra.mrb[0].mxu0 %v2147
    %v2215 = vpop.f32.mrb[0].mxu0
    %v2216 = vadd.f32 %v2144, %v2215
    %v2217 = vpop.f32.mrb[0].mxu0
    %2218 = vdwg.mxu0
    %v2219 = vld [vmem:[%s16] sm:$0xff]
    %v2220 = vld [vmem:[%s16 + $0x8] sm:$0xff]
    %v2221 = vld [vmem:[%s16 + $0x10] sm:$0xff]
    %v2222 = vld [vmem:[%s16 + $0x18] sm:$0xff]
    %v2223 = vld [vmem:[#allocation5] sm:$0x1]
    %v2225 = vlaneseq
    %v2226 = vshrl.u32 %v2225, 7
    %v2227 = vsub.s32 0, %v2226
    %v2228 = vrot.slane %v2223, %v2227
    %v2231 = vsel %vm193, %v2132, 0
    %2233 = vmatprep.subr.mxu0 0.0
    %2234 = vmatpush1.msra.mxu0 %v2219
    %2235 = vmatprep.subr.mxu0 0.0
    %2236 = vmatpush1.msra.mxu0 %v2220
    %2237 = vmatprep.subr.mxu0 0.0
    %2238 = vmatpush1.msra.mxu0 %v2221
    %2239 = vmatprep.subr.mxu0 0.0
    %2240 = vmatpush1.msra.mxu0 %v2222
    %2241 = vmatprep.subr.mxu0 0.0
    %2242 = vmatpush1.msra.mxu0 0.0
    %2243 = vmatprep.subr.mxu0 0.0
    %2244 = vmatpush1.msra.mxu0 0.0
    %2245 = vmatprep.subr.mxu0 0.0
    %2246 = vmatpush1.msra.mxu0 0.0
    %2247 = vmatprep.subr.mxu0 0.0
    %2248 = vmatpush1.msra.mxu0 0.0
    %2249 = vmatprep.subr.mxu0 0.0
    %2250 = vmatpush1.msra.mxu0 0.0
    %2251 = vmatprep.subr.mxu0 0.0
    %2252 = vmatpush1.msra.mxu0 0.0
    %2253 = vmatprep.subr.mxu0 0.0
    %2254 = vmatpush1.msra.mxu0 0.0
    %2255 = vmatprep.subr.mxu0 0.0
    %2256 = vmatpush1.msra.mxu0 0.0
    %2257 = vmatprep.subr.mxu0 0.0
    %2258 = vmatpush1.msra.mxu0 0.0
    %2259 = vmatprep.subr.mxu0 0.0
    %2260 = vmatpush1.msra.mxu0 0.0
    %2261 = vmatprep.subr.mxu0 0.0
    %2262 = vmatpush1.msra.mxu0 0.0
    %2263 = vmatprep.subr.mxu0 0.0
    %2264 = vmatpush1.msra.mxu0 0.0
    %2265 = vmatprep.subr.mxu0 0.0
    %2266 = vmatpush1.msra.mxu0 0.0
    %2267 = vmatprep.subr.mxu0 0.0
    %2268 = vmatpush1.msra.mxu0 0.0
    %2269 = vmatprep.subr.mxu0 0.0
    %2270 = vmatpush1.msra.mxu0 0.0
    %2271 = vmatprep.subr.mxu0 0.0
    %2272 = vmatpush1.msra.mxu0 0.0
    %2273 = vmatprep.subr.mxu0 0.0
    %2274 = vmatpush1.msra.mxu0 0.0
    %2275 = vmatprep.subr.mxu0 0.0
    %2276 = vmatpush1.msra.mxu0 0.0
    %2277 = vmatprep.subr.mxu0 0.0
    %2278 = vmatpush1.msra.mxu0 0.0
    %2279 = vmatprep.subr.mxu0 0.0
    %2280 = vmatpush1.msra.mxu0 0.0
    %2281 = vmatprep.subr.mxu0 0.0
    %2282 = vmatpush1.msra.mxu0 0.0
    %2283 = vmatprep.subr.mxu0 0.0
    %2284 = vmatpush1.msra.mxu0 0.0
    %2285 = vmatprep.subr.mxu0 0.0
    %2286 = vmatpush1.msra.mxu0 0.0
    %2287 = vmatprep.subr.mxu0 0.0
    %2288 = vmatpush1.msra.mxu0 0.0
    %2289 = vmatprep.subr.mxu0 0.0
    %2290 = vmatpush1.msra.mxu0 0.0
    %2291 = vmatprep.subr.mxu0 0.0
    %2292 = vmatpush1.msra.mxu0 0.0
    %2293 = vmatprep.subr.mxu0 0.0
    %2294 = vmatpush1.msra.mxu0 0.0
    %2295 = vmatprep.subr.mxu0 0.0
    %2296 = vmatpush1.msra.mxu0 0.0
    %2297 = vmatprep.mubr.f32.mxu0 0.0
    %2298 = vmatmul.mubr.f32.gmra.mrb[0].mxu0 %v2231
    %v2299 = vpop.f32.mrb[0].mxu0
    %v2300 = vadd.f32 %v2228, %v2299
    %v2301 = vpop.f32.mrb[0].mxu0
    %2302 = vdwg.mxu0
    %v2303 = vadd.f32 %v348, %v2216
    %v2304 = vadd.f32 %v2303, %v2300
    %vm2305 = vcmask 7168
    %2306 = vst.msk [vmem:[%s18] sm:$0xff] %vm2305, %v2304
    // Predicated region
    $region78: #{gcn4_forward.1} parent=1 // pred_check
      _
    $region79: #{gcn4_forward.1} parent=1 // pred_check_branch
      %2308 = sbr.rel (0) target = $region81
    $region80: #{gcn4_forward.1} parent=1 // pred_region
      _
    $region81: #{gcn4_forward.1} parent=1 // pred_fallthru
      _
    // Predicated region
    $region82: #{gcn4_forward.1} parent=1 // pred_check
      _
    $region83: #{gcn4_forward.1} parent=1 // pred_check_branch
      %2310 = sbr.rel (0) target = $region85
    $region84: #{gcn4_forward.1} parent=1 // pred_region
      _
    $region85: #{gcn4_forward.1} parent=1 // pred_fallthru
      _
    %2311 = vsyncpa [#allocation7], 1

</llo_original>
